<compile_context>
chip_gen: v6e
topology: v6e:2x2x1
jax: 0.10.0
libtpu: 0.0.40
codegen_flags: <defaults>
</compile_context>

<pallas_src>
import functools

import jax
import jax.numpy as jnp
import numpy as np
from jax.experimental import pallas as pl
from jax.experimental.pallas import tpu as pltpu


def _deconv_relu_kernel(x_ref, w_ref, b_ref, o_ref, *, cin, cout, h, w):
    """One image: polyphase ConvTranspose2d(k=3, s=2, p=1, op=1) + bias + ReLU.

    x_ref: (1, Cin, H, W)        input image (VMEM)
    w_ref: (9*Cin, Cout*W)       row (kh*3+kw)*Cin+ci holds weight[ci, co, kh, kw]
                                 replicated W times per co along lanes (VMEM)
    b_ref: (1, Cout*W)           bias replicated W times per co (VMEM)
    o_ref: (1, 2, 2, H, Cout*W)  o[0, a, b, p, co*W+q] = relu(y)[co, 2p+a, 2q+b]
    """
    cw = cout * w

    def wrow(kh, kw, ci):
        # (Cout*W,) lane vector of weight[ci, :, kh, kw] (each co value repeated W times).
        return w_ref[(kh * 3 + kw) * cin + ci]

    def lane_pack(a2d):
        # (H, W) -> (H, Cout*W): replicate along lanes so one FMA updates all Cout channels.
        return jnp.concatenate([a2d] * cout, axis=1)

    # Initialize every phase accumulator with the (lane-packed) bias: no separate bias add.
    bias = jnp.broadcast_to(b_ref[...], (h, cw))
    acc00 = bias  # even rows, even cols
    acc01 = bias  # even rows, odd  cols
    acc10 = bias  # odd  rows, even cols
    acc11 = bias  # odd  rows, odd  cols

    zrow = jnp.zeros((1, w), jnp.float32)
    zcol = jnp.zeros((h, 1), jnp.float32)

    for ci in range(cin):
        xi = x_ref[0, ci].astype(jnp.float32)                  # x[p, q]
        x_dn = jnp.concatenate([xi[1:, :], zrow], axis=0)      # x[p+1, q]   (0 past bottom edge)
        x_rt = jnp.concatenate([xi[:, 1:], zcol], axis=1)      # x[p, q+1]   (0 past right edge)
        x_dr = jnp.concatenate([x_dn[:, 1:], zcol], axis=1)    # x[p+1, q+1]

        t = lane_pack(xi)
        t_dn = lane_pack(x_dn)
        t_rt = lane_pack(x_rt)
        t_dr = lane_pack(x_dr)

        # y[2p,   2q  ] += x[p,q] * W[1,1]
        acc00 = acc00 + t * wrow(1, 1, ci)
        # y[2p,   2q+1] += x[p,q+1]*W[1,0] + x[p,q]*W[1,2]
        acc01 = acc01 + t_rt * wrow(1, 0, ci) + t * wrow(1, 2, ci)
        # y[2p+1, 2q  ] += x[p+1,q]*W[0,1] + x[p,q]*W[2,1]
        acc10 = acc10 + t_dn * wrow(0, 1, ci) + t * wrow(2, 1, ci)
        # y[2p+1, 2q+1] += x[p+1,q+1]*W[0,0] + x[p+1,q]*W[0,2] + x[p,q+1]*W[2,0] + x[p,q]*W[2,2]
        acc11 = (acc11
                 + t_dr * wrow(0, 0, ci) + t_dn * wrow(0, 2, ci)
                 + t_rt * wrow(2, 0, ci) + t * wrow(2, 2, ci))

    o_ref[0, 0, 0] = jnp.maximum(acc00, 0.0).astype(o_ref.dtype)
    o_ref[0, 0, 1] = jnp.maximum(acc01, 0.0).astype(o_ref.dtype)
    o_ref[0, 1, 0] = jnp.maximum(acc10, 0.0).astype(o_ref.dtype)
    o_ref[0, 1, 1] = jnp.maximum(acc11, 0.0).astype(o_ref.dtype)


def up_deconv_forward(x_nchw, weight, bias):
    """Forward pass of _up_deconv.

    x_nchw: (N, Cin, H, W) float32
    weight: (Cin, Cout, 3, 3) float32   (PyTorch ConvTranspose2d weight layout)
    bias:   (Cout,) float32
    returns (N, Cout, 2H, 2W) float32
    """
    n, cin, h, w = x_nchw.shape
    cout = weight.shape[1]
    cw = cout * w

    # Pack weights/bias to the lane layout used in-kernel (lane l = co*W + q):
    #   w_packed[(kh*3+kw)*Cin + ci, co*W + q] = weight[ci, co, kh, kw]
    wt = jnp.transpose(weight, (2, 3, 0, 1))                                  # (3,3,Cin,Cout)
    w_packed = jnp.repeat(wt, w, axis=3).reshape(9 * cin, cw).astype(jnp.float32)
    b_packed = jnp.repeat(bias, w)[None, :].astype(jnp.float32)               # (1, Cout*W)

    kernel = functools.partial(_deconv_relu_kernel, cin=cin, cout=cout, h=h, w=w)

    out_phases = pl.pallas_call(
        kernel,
        out_shape=jax.ShapeDtypeStruct((n, 2, 2, h, cw), x_nchw.dtype),
        grid=(n,),
        in_specs=[
            pl.BlockSpec((1, cin, h, w), lambda i: (i, 0, 0, 0)),
            pl.BlockSpec((9 * cin, cw), lambda i: (0, 0)),
            pl.BlockSpec((1, cw), lambda i: (0, 0)),
        ],
        out_specs=pl.BlockSpec((1, 2, 2, h, cw), lambda i: (i, 0, 0, 0, 0)),
        compiler_params=pltpu.CompilerParams(dimension_semantics=("parallel",)),
    )(x_nchw, w_packed, b_packed)

    # Layout plumbing back to NCHW: (n, a, b, p, co, q) -> (n, co, p, a, q, b) -> (n, co, 2H, 2W).
    y = out_phases.reshape(n, 2, 2, h, cout, w)
    y = jnp.transpose(y, (0, 4, 3, 1, 5, 2))
    return y.reshape(n, cout, 2 * h, 2 * w)


def reference_forward(x_nchw, weight, bias):
    """Pure-JAX reference for PyTorch ConvTranspose2d(k=3, s=2, p=1, op=1) + ReLU."""
    w_ref = jnp.transpose(weight[:, :, ::-1, ::-1], (1, 0, 2, 3))   # flipped kernel, OIHW
    y = jax.lax.conv_general_dilated(
        x_nchw, w_ref,
        window_strides=(1, 1),
        padding=((1, 2), (1, 2)),
        lhs_dilation=(2, 2),
        dimension_numbers=("NCHW", "OIHW", "NCHW"),
    )
    y = y + bias.reshape(1, -1, 1, 1)
    return jnp.maximum(y, 0.0)


if __name__ == "__main__":
    key = jax.random.PRNGKey(0)
    k1, k2, k3 = jax.random.split(key, 3)

    N, Cin, H, W = 2, 4, 16, 16
    Cout = 8

    x = jax.random.normal(k1, (N, Cin, H, W), jnp.float32)
    # Deterministic parameter init (PyTorch-style uniform bound), shapes from __init__.
    bound = 1.0 / np.sqrt(Cin * 3 * 3)
    weight = jax.random.uniform(k2, (Cin, Cout, 3, 3), jnp.float32, -bound, bound)
    bias = jax.random.uniform(k3, (Cout,), jnp.float32, -bound, bound)

    fwd = jax.jit(up_deconv_forward)
    out = jax.block_until_ready(fwd(x, weight, bias))
    ref = jax.block_until_ready(reference_forward(x, weight, bias))

    assert out.shape == (N, Cout, 2 * H, 2 * W), out.shape
    np.testing.assert_allclose(np.asarray(out), np.asarray(ref), rtol=1e-4, atol=1e-4)

    print("KERNEL_OK")
</pallas_src>

<mosaic_0001>
module attributes {stable_mosaic.version = 11 : i64} {
  func.func @_deconv_relu_kernel(%arg0: i32, %arg1: memref<1x4x16x16xf32, #tpu.memory_space<vmem>>, %arg2: memref<36x128xf32, #tpu.memory_space<vmem>>, %arg3: memref<1x128xf32, #tpu.memory_space<vmem>>, %arg4: memref<1x2x2x16x128xf32, #tpu.memory_space<vmem>>) attributes {dimension_semantics = [#tpu.dimension_semantics<parallel>], iteration_bounds = array<i64: 2>, scalar_prefetch = 0 : i64, scratch_operands = 0 : i64, tpu.core_type = #tpu.core_type<tc>, window_params = [{transform_indices = @transform_0, window_bounds = array<i64: 1, 4, 16, 16>}, {pipeline_mode = #tpu.pipeline_mode<synchronous>, transform_indices = @transform_1, window_bounds = array<i64: 36, 128>}, {pipeline_mode = #tpu.pipeline_mode<synchronous>, transform_indices = @transform_2, window_bounds = array<i64: 1, 128>}, {transform_indices = @transform_3, window_bounds = array<i64: 1, 2, 2, 16, 128>}]} {
    %c0 = arith.constant 0 : index
    %c0_0 = arith.constant 0 : index
    %0 = vector.load %arg3[%c0, %c0_0] : memref<1x128xf32, #tpu.memory_space<vmem>>, vector<1x128xf32>
    %1 = vector.shape_cast %0 : vector<1x128xf32> to vector<1x128xf32>
    %2 = vector.broadcast %1 : vector<1x128xf32> to vector<16x128xf32>
    %cst = arith.constant 0.000000e+00 : f32
    %3 = vector.broadcast %cst : f32 to vector<1x16xf32>
    %cst_1 = arith.constant 0.000000e+00 : f32
    %4 = vector.broadcast %cst_1 : f32 to vector<16x1xf32>
    %c0_2 = arith.constant 0 : index
    %c0_3 = arith.constant 0 : index
    %c0_4 = arith.constant 0 : index
    %c0_5 = arith.constant 0 : index
    %5 = vector.load %arg1[%c0_2, %c0_3, %c0_4, %c0_5] : memref<1x4x16x16xf32, #tpu.memory_space<vmem>>, vector<1x1x16x16xf32>
    %6 = vector.shape_cast %5 : vector<1x1x16x16xf32> to vector<16x16xf32>
    %7 = vector.extract_strided_slice %6 {offsets = [1, 0], sizes = [15, 16], strides = [1, 1]} : vector<16x16xf32> to vector<15x16xf32>
    %8 = tpu.concatenate %7, %3 in 0 : vector<15x16xf32>, vector<1x16xf32> -> vector<16x16xf32>
    %9 = vector.extract_strided_slice %6 {offsets = [0, 1], sizes = [16, 15], strides = [1, 1]} : vector<16x16xf32> to vector<16x15xf32>
    %10 = tpu.concatenate %9, %4 in 1 : vector<16x15xf32>, vector<16x1xf32> -> vector<16x16xf32>
    %11 = vector.extract_strided_slice %8 {offsets = [0, 1], sizes = [16, 15], strides = [1, 1]} : vector<16x16xf32> to vector<16x15xf32>
    %12 = tpu.concatenate %11, %4 in 1 : vector<16x15xf32>, vector<16x1xf32> -> vector<16x16xf32>
    %13 = tpu.concatenate %6, %6, %6, %6, %6, %6, %6, %6 in 1 : vector<16x16xf32>, vector<16x16xf32>, vector<16x16xf32>, vector<16x16xf32>, vector<16x16xf32>, vector<16x16xf32>, vector<16x16xf32>, vector<16x16xf32> -> vector<16x128xf32>
    %14 = tpu.concatenate %8, %8, %8, %8, %8, %8, %8, %8 in 1 : vector<16x16xf32>, vector<16x16xf32>, vector<16x16xf32>, vector<16x16xf32>, vector<16x16xf32>, vector<16x16xf32>, vector<16x16xf32>, vector<16x16xf32> -> vector<16x128xf32>
    %15 = tpu.concatenate %10, %10, %10, %10, %10, %10, %10, %10 in 1 : vector<16x16xf32>, vector<16x16xf32>, vector<16x16xf32>, vector<16x16xf32>, vector<16x16xf32>, vector<16x16xf32>, vector<16x16xf32>, vector<16x16xf32> -> vector<16x128xf32>
    %16 = tpu.concatenate %12, %12, %12, %12, %12, %12, %12, %12 in 1 : vector<16x16xf32>, vector<16x16xf32>, vector<16x16xf32>, vector<16x16xf32>, vector<16x16xf32>, vector<16x16xf32>, vector<16x16xf32>, vector<16x16xf32> -> vector<16x128xf32>
    %c16 = arith.constant 16 : index
    %c0_6 = arith.constant 0 : index
    %17 = vector.load %arg2[%c16, %c0_6] : memref<36x128xf32, #tpu.memory_space<vmem>>, vector<1x128xf32>
    %18 = vector.shape_cast %17 : vector<1x128xf32> to vector<128xf32>
    %19 = vector.shape_cast %18 : vector<128xf32> to vector<1x128xf32>
    %20 = vector.broadcast %19 : vector<1x128xf32> to vector<16x128xf32>
    %21 = arith.mulf %13, %20 : vector<16x128xf32>
    %22 = arith.addf %2, %21 : vector<16x128xf32>
    %c12 = arith.constant 12 : index
    %c0_7 = arith.constant 0 : index
    %23 = vector.load %arg2[%c12, %c0_7] : memref<36x128xf32, #tpu.memory_space<vmem>>, vector<1x128xf32>
    %24 = vector.shape_cast %23 : vector<1x128xf32> to vector<128xf32>
    %25 = vector.shape_cast %24 : vector<128xf32> to vector<1x128xf32>
    %26 = vector.broadcast %25 : vector<1x128xf32> to vector<16x128xf32>
    %27 = arith.mulf %15, %26 : vector<16x128xf32>
    %28 = arith.addf %2, %27 : vector<16x128xf32>
    %c20 = arith.constant 20 : index
    %c0_8 = arith.constant 0 : index
    %29 = vector.load %arg2[%c20, %c0_8] : memref<36x128xf32, #tpu.memory_space<vmem>>, vector<1x128xf32>
    %30 = vector.shape_cast %29 : vector<1x128xf32> to vector<128xf32>
    %31 = vector.shape_cast %30 : vector<128xf32> to vector<1x128xf32>
    %32 = vector.broadcast %31 : vector<1x128xf32> to vector<16x128xf32>
    %33 = arith.mulf %13, %32 : vector<16x128xf32>
    %34 = arith.addf %28, %33 : vector<16x128xf32>
    %c4 = arith.constant 4 : index
    %c0_9 = arith.constant 0 : index
    %35 = vector.load %arg2[%c4, %c0_9] : memref<36x128xf32, #tpu.memory_space<vmem>>, vector<1x128xf32>
    %36 = vector.shape_cast %35 : vector<1x128xf32> to vector<128xf32>
    %37 = vector.shape_cast %36 : vector<128xf32> to vector<1x128xf32>
    %38 = vector.broadcast %37 : vector<1x128xf32> to vector<16x128xf32>
    %39 = arith.mulf %14, %38 : vector<16x128xf32>
    %40 = arith.addf %2, %39 : vector<16x128xf32>
    %c28 = arith.constant 28 : index
    %c0_10 = arith.constant 0 : index
    %41 = vector.load %arg2[%c28, %c0_10] : memref<36x128xf32, #tpu.memory_space<vmem>>, vector<1x128xf32>
    %42 = vector.shape_cast %41 : vector<1x128xf32> to vector<128xf32>
    %43 = vector.shape_cast %42 : vector<128xf32> to vector<1x128xf32>
    %44 = vector.broadcast %43 : vector<1x128xf32> to vector<16x128xf32>
    %45 = arith.mulf %13, %44 : vector<16x128xf32>
    %46 = arith.addf %40, %45 : vector<16x128xf32>
    %c0_11 = arith.constant 0 : index
    %c0_12 = arith.constant 0 : index
    %47 = vector.load %arg2[%c0_11, %c0_12] : memref<36x128xf32, #tpu.memory_space<vmem>>, vector<1x128xf32>
    %48 = vector.shape_cast %47 : vector<1x128xf32> to vector<128xf32>
    %49 = vector.shape_cast %48 : vector<128xf32> to vector<1x128xf32>
    %50 = vector.broadcast %49 : vector<1x128xf32> to vector<16x128xf32>
    %51 = arith.mulf %16, %50 : vector<16x128xf32>
    %52 = arith.addf %2, %51 : vector<16x128xf32>
    %c8 = arith.constant 8 : index
    %c0_13 = arith.constant 0 : index
    %53 = vector.load %arg2[%c8, %c0_13] : memref<36x128xf32, #tpu.memory_space<vmem>>, vector<1x128xf32>
    %54 = vector.shape_cast %53 : vector<1x128xf32> to vector<128xf32>
    %55 = vector.shape_cast %54 : vector<128xf32> to vector<1x128xf32>
    %56 = vector.broadcast %55 : vector<1x128xf32> to vector<16x128xf32>
    %57 = arith.mulf %14, %56 : vector<16x128xf32>
    %58 = arith.addf %52, %57 : vector<16x128xf32>
    %c24 = arith.constant 24 : index
    %c0_14 = arith.constant 0 : index
    %59 = vector.load %arg2[%c24, %c0_14] : memref<36x128xf32, #tpu.memory_space<vmem>>, vector<1x128xf32>
    %60 = vector.shape_cast %59 : vector<1x128xf32> to vector<128xf32>
    %61 = vector.shape_cast %60 : vector<128xf32> to vector<1x128xf32>
    %62 = vector.broadcast %61 : vector<1x128xf32> to vector<16x128xf32>
    %63 = arith.mulf %15, %62 : vector<16x128xf32>
    %64 = arith.addf %58, %63 : vector<16x128xf32>
    %c32 = arith.constant 32 : index
    %c0_15 = arith.constant 0 : index
    %65 = vector.load %arg2[%c32, %c0_15] : memref<36x128xf32, #tpu.memory_space<vmem>>, vector<1x128xf32>
    %66 = vector.shape_cast %65 : vector<1x128xf32> to vector<128xf32>
    %67 = vector.shape_cast %66 : vector<128xf32> to vector<1x128xf32>
    %68 = vector.broadcast %67 : vector<1x128xf32> to vector<16x128xf32>
    %69 = arith.mulf %13, %68 : vector<16x128xf32>
    %70 = arith.addf %64, %69 : vector<16x128xf32>
    %c0_16 = arith.constant 0 : index
    %c1 = arith.constant 1 : index
    %c0_17 = arith.constant 0 : index
    %c0_18 = arith.constant 0 : index
    %71 = vector.load %arg1[%c0_16, %c1, %c0_17, %c0_18] : memref<1x4x16x16xf32, #tpu.memory_space<vmem>>, vector<1x1x16x16xf32>
    %72 = vector.shape_cast %71 : vector<1x1x16x16xf32> to vector<16x16xf32>
    %73 = vector.extract_strided_slice %72 {offsets = [1, 0], sizes = [15, 16], strides = [1, 1]} : vector<16x16xf32> to vector<15x16xf32>
    %74 = tpu.concatenate %73, %3 in 0 : vector<15x16xf32>, vector<1x16xf32> -> vector<16x16xf32>
    %75 = vector.extract_strided_slice %72 {offsets = [0, 1], sizes = [16, 15], strides = [1, 1]} : vector<16x16xf32> to vector<16x15xf32>
    %76 = tpu.concatenate %75, %4 in 1 : vector<16x15xf32>, vector<16x1xf32> -> vector<16x16xf32>
    %77 = vector.extract_strided_slice %74 {offsets = [0, 1], sizes = [16, 15], strides = [1, 1]} : vector<16x16xf32> to vector<16x15xf32>
    %78 = tpu.concatenate %77, %4 in 1 : vector<16x15xf32>, vector<16x1xf32> -> vector<16x16xf32>
    %79 = tpu.concatenate %72, %72, %72, %72, %72, %72, %72, %72 in 1 : vector<16x16xf32>, vector<16x16xf32>, vector<16x16xf32>, vector<16x16xf32>, vector<16x16xf32>, vector<16x16xf32>, vector<16x16xf32>, vector<16x16xf32> -> vector<16x128xf32>
    %80 = tpu.concatenate %74, %74, %74, %74, %74, %74, %74, %74 in 1 : vector<16x16xf32>, vector<16x16xf32>, vector<16x16xf32>, vector<16x16xf32>, vector<16x16xf32>, vector<16x16xf32>, vector<16x16xf32>, vector<16x16xf32> -> vector<16x128xf32>
    %81 = tpu.concatenate %76, %76, %76, %76, %76, %76, %76, %76 in 1 : vector<16x16xf32>, vector<16x16xf32>, vector<16x16xf32>, vector<16x16xf32>, vector<16x16xf32>, vector<16x16xf32>, vector<16x16xf32>, vector<16x16xf32> -> vector<16x128xf32>
    %82 = tpu.concatenate %78, %78, %78, %78, %78, %78, %78, %78 in 1 : vector<16x16xf32>, vector<16x16xf32>, vector<16x16xf32>, vector<16x16xf32>, vector<16x16xf32>, vector<16x16xf32>, vector<16x16xf32>, vector<16x16xf32> -> vector<16x128xf32>
    %c17 = arith.constant 17 : index
    %c0_19 = arith.constant 0 : index
    %83 = vector.load %arg2[%c17, %c0_19] : memref<36x128xf32, #tpu.memory_space<vmem>>, vector<1x128xf32>
    %84 = vector.shape_cast %83 : vector<1x128xf32> to vector<128xf32>
    %85 = vector.shape_cast %84 : vector<128xf32> to vector<1x128xf32>
    %86 = vector.broadcast %85 : vector<1x128xf32> to vector<16x128xf32>
    %87 = arith.mulf %79, %86 : vector<16x128xf32>
    %88 = arith.addf %22, %87 : vector<16x128xf32>
    %c13 = arith.constant 13 : index
    %c0_20 = arith.constant 0 : index
    %89 = vector.load %arg2[%c13, %c0_20] : memref<36x128xf32, #tpu.memory_space<vmem>>, vector<1x128xf32>
    %90 = vector.shape_cast %89 : vector<1x128xf32> to vector<128xf32>
    %91 = vector.shape_cast %90 : vector<128xf32> to vector<1x128xf32>
    %92 = vector.broadcast %91 : vector<1x128xf32> to vector<16x128xf32>
    %93 = arith.mulf %81, %92 : vector<16x128xf32>
    %94 = arith.addf %34, %93 : vector<16x128xf32>
    %c21 = arith.constant 21 : index
    %c0_21 = arith.constant 0 : index
    %95 = vector.load %arg2[%c21, %c0_21] : memref<36x128xf32, #tpu.memory_space<vmem>>, vector<1x128xf32>
    %96 = vector.shape_cast %95 : vector<1x128xf32> to vector<128xf32>
    %97 = vector.shape_cast %96 : vector<128xf32> to vector<1x128xf32>
    %98 = vector.broadcast %97 : vector<1x128xf32> to vector<16x128xf32>
    %99 = arith.mulf %79, %98 : vector<16x128xf32>
    %100 = arith.addf %94, %99 : vector<16x128xf32>
    %c5 = arith.constant 5 : index
    %c0_22 = arith.constant 0 : index
    %101 = vector.load %arg2[%c5, %c0_22] : memref<36x128xf32, #tpu.memory_space<vmem>>, vector<1x128xf32>
    %102 = vector.shape_cast %101 : vector<1x128xf32> to vector<128xf32>
    %103 = vector.shape_cast %102 : vector<128xf32> to vector<1x128xf32>
    %104 = vector.broadcast %103 : vector<1x128xf32> to vector<16x128xf32>
    %105 = arith.mulf %80, %104 : vector<16x128xf32>
    %106 = arith.addf %46, %105 : vector<16x128xf32>
    %c29 = arith.constant 29 : index
    %c0_23 = arith.constant 0 : index
    %107 = vector.load %arg2[%c29, %c0_23] : memref<36x128xf32, #tpu.memory_space<vmem>>, vector<1x128xf32>
    %108 = vector.shape_cast %107 : vector<1x128xf32> to vector<128xf32>
    %109 = vector.shape_cast %108 : vector<128xf32> to vector<1x128xf32>
    %110 = vector.broadcast %109 : vector<1x128xf32> to vector<16x128xf32>
    %111 = arith.mulf %79, %110 : vector<16x128xf32>
    %112 = arith.addf %106, %111 : vector<16x128xf32>
    %c1_24 = arith.constant 1 : index
    %c0_25 = arith.constant 0 : index
    %113 = vector.load %arg2[%c1_24, %c0_25] : memref<36x128xf32, #tpu.memory_space<vmem>>, vector<1x128xf32>
    %114 = vector.shape_cast %113 : vector<1x128xf32> to vector<128xf32>
    %115 = vector.shape_cast %114 : vector<128xf32> to vector<1x128xf32>
    %116 = vector.broadcast %115 : vector<1x128xf32> to vector<16x128xf32>
    %117 = arith.mulf %82, %116 : vector<16x128xf32>
    %118 = arith.addf %70, %117 : vector<16x128xf32>
    %c9 = arith.constant 9 : index
    %c0_26 = arith.constant 0 : index
    %119 = vector.load %arg2[%c9, %c0_26] : memref<36x128xf32, #tpu.memory_space<vmem>>, vector<1x128xf32>
    %120 = vector.shape_cast %119 : vector<1x128xf32> to vector<128xf32>
    %121 = vector.shape_cast %120 : vector<128xf32> to vector<1x128xf32>
    %122 = vector.broadcast %121 : vector<1x128xf32> to vector<16x128xf32>
    %123 = arith.mulf %80, %122 : vector<16x128xf32>
    %124 = arith.addf %118, %123 : vector<16x128xf32>
    %c25 = arith.constant 25 : index
    %c0_27 = arith.constant 0 : index
    %125 = vector.load %arg2[%c25, %c0_27] : memref<36x128xf32, #tpu.memory_space<vmem>>, vector<1x128xf32>
    %126 = vector.shape_cast %125 : vector<1x128xf32> to vector<128xf32>
    %127 = vector.shape_cast %126 : vector<128xf32> to vector<1x128xf32>
    %128 = vector.broadcast %127 : vector<1x128xf32> to vector<16x128xf32>
    %129 = arith.mulf %81, %128 : vector<16x128xf32>
    %130 = arith.addf %124, %129 : vector<16x128xf32>
    %c33 = arith.constant 33 : index
    %c0_28 = arith.constant 0 : index
    %131 = vector.load %arg2[%c33, %c0_28] : memref<36x128xf32, #tpu.memory_space<vmem>>, vector<1x128xf32>
    %132 = vector.shape_cast %131 : vector<1x128xf32> to vector<128xf32>
    %133 = vector.shape_cast %132 : vector<128xf32> to vector<1x128xf32>
    %134 = vector.broadcast %133 : vector<1x128xf32> to vector<16x128xf32>
    %135 = arith.mulf %79, %134 : vector<16x128xf32>
    %136 = arith.addf %130, %135 : vector<16x128xf32>
    %c0_29 = arith.constant 0 : index
    %c2 = arith.constant 2 : index
    %c0_30 = arith.constant 0 : index
    %c0_31 = arith.constant 0 : index
    %137 = vector.load %arg1[%c0_29, %c2, %c0_30, %c0_31] : memref<1x4x16x16xf32, #tpu.memory_space<vmem>>, vector<1x1x16x16xf32>
    %138 = vector.shape_cast %137 : vector<1x1x16x16xf32> to vector<16x16xf32>
    %139 = vector.extract_strided_slice %138 {offsets = [1, 0], sizes = [15, 16], strides = [1, 1]} : vector<16x16xf32> to vector<15x16xf32>
    %140 = tpu.concatenate %139, %3 in 0 : vector<15x16xf32>, vector<1x16xf32> -> vector<16x16xf32>
    %141 = vector.extract_strided_slice %138 {offsets = [0, 1], sizes = [16, 15], strides = [1, 1]} : vector<16x16xf32> to vector<16x15xf32>
    %142 = tpu.concatenate %141, %4 in 1 : vector<16x15xf32>, vector<16x1xf32> -> vector<16x16xf32>
    %143 = vector.extract_strided_slice %140 {offsets = [0, 1], sizes = [16, 15], strides = [1, 1]} : vector<16x16xf32> to vector<16x15xf32>
    %144 = tpu.concatenate %143, %4 in 1 : vector<16x15xf32>, vector<16x1xf32> -> vector<16x16xf32>
    %145 = tpu.concatenate %138, %138, %138, %138, %138, %138, %138, %138 in 1 : vector<16x16xf32>, vector<16x16xf32>, vector<16x16xf32>, vector<16x16xf32>, vector<16x16xf32>, vector<16x16xf32>, vector<16x16xf32>, vector<16x16xf32> -> vector<16x128xf32>
    %146 = tpu.concatenate %140, %140, %140, %140, %140, %140, %140, %140 in 1 : vector<16x16xf32>, vector<16x16xf32>, vector<16x16xf32>, vector<16x16xf32>, vector<16x16xf32>, vector<16x16xf32>, vector<16x16xf32>, vector<16x16xf32> -> vector<16x128xf32>
    %147 = tpu.concatenate %142, %142, %142, %142, %142, %142, %142, %142 in 1 : vector<16x16xf32>, vector<16x16xf32>, vector<16x16xf32>, vector<16x16xf32>, vector<16x16xf32>, vector<16x16xf32>, vector<16x16xf32>, vector<16x16xf32> -> vector<16x128xf32>
    %148 = tpu.concatenate %144, %144, %144, %144, %144, %144, %144, %144 in 1 : vector<16x16xf32>, vector<16x16xf32>, vector<16x16xf32>, vector<16x16xf32>, vector<16x16xf32>, vector<16x16xf32>, vector<16x16xf32>, vector<16x16xf32> -> vector<16x128xf32>
    %c18 = arith.constant 18 : index
    %c0_32 = arith.constant 0 : index
    %149 = vector.load %arg2[%c18, %c0_32] : memref<36x128xf32, #tpu.memory_space<vmem>>, vector<1x128xf32>
    %150 = vector.shape_cast %149 : vector<1x128xf32> to vector<128xf32>
    %151 = vector.shape_cast %150 : vector<128xf32> to vector<1x128xf32>
    %152 = vector.broadcast %151 : vector<1x128xf32> to vector<16x128xf32>
    %153 = arith.mulf %145, %152 : vector<16x128xf32>
    %154 = arith.addf %88, %153 : vector<16x128xf32>
    %c14 = arith.constant 14 : index
    %c0_33 = arith.constant 0 : index
    %155 = vector.load %arg2[%c14, %c0_33] : memref<36x128xf32, #tpu.memory_space<vmem>>, vector<1x128xf32>
    %156 = vector.shape_cast %155 : vector<1x128xf32> to vector<128xf32>
    %157 = vector.shape_cast %156 : vector<128xf32> to vector<1x128xf32>
    %158 = vector.broadcast %157 : vector<1x128xf32> to vector<16x128xf32>
    %159 = arith.mulf %147, %158 : vector<16x128xf32>
    %160 = arith.addf %100, %159 : vector<16x128xf32>
    %c22 = arith.constant 22 : index
    %c0_34 = arith.constant 0 : index
    %161 = vector.load %arg2[%c22, %c0_34] : memref<36x128xf32, #tpu.memory_space<vmem>>, vector<1x128xf32>
    %162 = vector.shape_cast %161 : vector<1x128xf32> to vector<128xf32>
    %163 = vector.shape_cast %162 : vector<128xf32> to vector<1x128xf32>
    %164 = vector.broadcast %163 : vector<1x128xf32> to vector<16x128xf32>
    %165 = arith.mulf %145, %164 : vector<16x128xf32>
    %166 = arith.addf %160, %165 : vector<16x128xf32>
    %c6 = arith.constant 6 : index
    %c0_35 = arith.constant 0 : index
    %167 = vector.load %arg2[%c6, %c0_35] : memref<36x128xf32, #tpu.memory_space<vmem>>, vector<1x128xf32>
    %168 = vector.shape_cast %167 : vector<1x128xf32> to vector<128xf32>
    %169 = vector.shape_cast %168 : vector<128xf32> to vector<1x128xf32>
    %170 = vector.broadcast %169 : vector<1x128xf32> to vector<16x128xf32>
    %171 = arith.mulf %146, %170 : vector<16x128xf32>
    %172 = arith.addf %112, %171 : vector<16x128xf32>
    %c30 = arith.constant 30 : index
    %c0_36 = arith.constant 0 : index
    %173 = vector.load %arg2[%c30, %c0_36] : memref<36x128xf32, #tpu.memory_space<vmem>>, vector<1x128xf32>
    %174 = vector.shape_cast %173 : vector<1x128xf32> to vector<128xf32>
    %175 = vector.shape_cast %174 : vector<128xf32> to vector<1x128xf32>
    %176 = vector.broadcast %175 : vector<1x128xf32> to vector<16x128xf32>
    %177 = arith.mulf %145, %176 : vector<16x128xf32>
    %178 = arith.addf %172, %177 : vector<16x128xf32>
    %c2_37 = arith.constant 2 : index
    %c0_38 = arith.constant 0 : index
    %179 = vector.load %arg2[%c2_37, %c0_38] : memref<36x128xf32, #tpu.memory_space<vmem>>, vector<1x128xf32>
    %180 = vector.shape_cast %179 : vector<1x128xf32> to vector<128xf32>
    %181 = vector.shape_cast %180 : vector<128xf32> to vector<1x128xf32>
    %182 = vector.broadcast %181 : vector<1x128xf32> to vector<16x128xf32>
    %183 = arith.mulf %148, %182 : vector<16x128xf32>
    %184 = arith.addf %136, %183 : vector<16x128xf32>
    %c10 = arith.constant 10 : index
    %c0_39 = arith.constant 0 : index
    %185 = vector.load %arg2[%c10, %c0_39] : memref<36x128xf32, #tpu.memory_space<vmem>>, vector<1x128xf32>
    %186 = vector.shape_cast %185 : vector<1x128xf32> to vector<128xf32>
    %187 = vector.shape_cast %186 : vector<128xf32> to vector<1x128xf32>
    %188 = vector.broadcast %187 : vector<1x128xf32> to vector<16x128xf32>
    %189 = arith.mulf %146, %188 : vector<16x128xf32>
    %190 = arith.addf %184, %189 : vector<16x128xf32>
    %c26 = arith.constant 26 : index
    %c0_40 = arith.constant 0 : index
    %191 = vector.load %arg2[%c26, %c0_40] : memref<36x128xf32, #tpu.memory_space<vmem>>, vector<1x128xf32>
    %192 = vector.shape_cast %191 : vector<1x128xf32> to vector<128xf32>
    %193 = vector.shape_cast %192 : vector<128xf32> to vector<1x128xf32>
    %194 = vector.broadcast %193 : vector<1x128xf32> to vector<16x128xf32>
    %195 = arith.mulf %147, %194 : vector<16x128xf32>
    %196 = arith.addf %190, %195 : vector<16x128xf32>
    %c34 = arith.constant 34 : index
    %c0_41 = arith.constant 0 : index
    %197 = vector.load %arg2[%c34, %c0_41] : memref<36x128xf32, #tpu.memory_space<vmem>>, vector<1x128xf32>
    %198 = vector.shape_cast %197 : vector<1x128xf32> to vector<128xf32>
    %199 = vector.shape_cast %198 : vector<128xf32> to vector<1x128xf32>
    %200 = vector.broadcast %199 : vector<1x128xf32> to vector<16x128xf32>
    %201 = arith.mulf %145, %200 : vector<16x128xf32>
    %202 = arith.addf %196, %201 : vector<16x128xf32>
    %c0_42 = arith.constant 0 : index
    %c3 = arith.constant 3 : index
    %c0_43 = arith.constant 0 : index
    %c0_44 = arith.constant 0 : index
    %203 = vector.load %arg1[%c0_42, %c3, %c0_43, %c0_44] : memref<1x4x16x16xf32, #tpu.memory_space<vmem>>, vector<1x1x16x16xf32>
    %204 = vector.shape_cast %203 : vector<1x1x16x16xf32> to vector<16x16xf32>
    %205 = vector.extract_strided_slice %204 {offsets = [1, 0], sizes = [15, 16], strides = [1, 1]} : vector<16x16xf32> to vector<15x16xf32>
    %206 = tpu.concatenate %205, %3 in 0 : vector<15x16xf32>, vector<1x16xf32> -> vector<16x16xf32>
    %207 = vector.extract_strided_slice %204 {offsets = [0, 1], sizes = [16, 15], strides = [1, 1]} : vector<16x16xf32> to vector<16x15xf32>
    %208 = tpu.concatenate %207, %4 in 1 : vector<16x15xf32>, vector<16x1xf32> -> vector<16x16xf32>
    %209 = vector.extract_strided_slice %206 {offsets = [0, 1], sizes = [16, 15], strides = [1, 1]} : vector<16x16xf32> to vector<16x15xf32>
    %210 = tpu.concatenate %209, %4 in 1 : vector<16x15xf32>, vector<16x1xf32> -> vector<16x16xf32>
    %211 = tpu.concatenate %204, %204, %204, %204, %204, %204, %204, %204 in 1 : vector<16x16xf32>, vector<16x16xf32>, vector<16x16xf32>, vector<16x16xf32>, vector<16x16xf32>, vector<16x16xf32>, vector<16x16xf32>, vector<16x16xf32> -> vector<16x128xf32>
    %212 = tpu.concatenate %206, %206, %206, %206, %206, %206, %206, %206 in 1 : vector<16x16xf32>, vector<16x16xf32>, vector<16x16xf32>, vector<16x16xf32>, vector<16x16xf32>, vector<16x16xf32>, vector<16x16xf32>, vector<16x16xf32> -> vector<16x128xf32>
    %213 = tpu.concatenate %208, %208, %208, %208, %208, %208, %208, %208 in 1 : vector<16x16xf32>, vector<16x16xf32>, vector<16x16xf32>, vector<16x16xf32>, vector<16x16xf32>, vector<16x16xf32>, vector<16x16xf32>, vector<16x16xf32> -> vector<16x128xf32>
    %214 = tpu.concatenate %210, %210, %210, %210, %210, %210, %210, %210 in 1 : vector<16x16xf32>, vector<16x16xf32>, vector<16x16xf32>, vector<16x16xf32>, vector<16x16xf32>, vector<16x16xf32>, vector<16x16xf32>, vector<16x16xf32> -> vector<16x128xf32>
    %c19 = arith.constant 19 : index
    %c0_45 = arith.constant 0 : index
    %215 = vector.load %arg2[%c19, %c0_45] : memref<36x128xf32, #tpu.memory_space<vmem>>, vector<1x128xf32>
    %216 = vector.shape_cast %215 : vector<1x128xf32> to vector<128xf32>
    %217 = vector.shape_cast %216 : vector<128xf32> to vector<1x128xf32>
    %218 = vector.broadcast %217 : vector<1x128xf32> to vector<16x128xf32>
    %219 = arith.mulf %211, %218 : vector<16x128xf32>
    %220 = arith.addf %154, %219 : vector<16x128xf32>
    %c15 = arith.constant 15 : index
    %c0_46 = arith.constant 0 : index
    %221 = vector.load %arg2[%c15, %c0_46] : memref<36x128xf32, #tpu.memory_space<vmem>>, vector<1x128xf32>
    %222 = vector.shape_cast %221 : vector<1x128xf32> to vector<128xf32>
    %223 = vector.shape_cast %222 : vector<128xf32> to vector<1x128xf32>
    %224 = vector.broadcast %223 : vector<1x128xf32> to vector<16x128xf32>
    %225 = arith.mulf %213, %224 : vector<16x128xf32>
    %226 = arith.addf %166, %225 : vector<16x128xf32>
    %c23 = arith.constant 23 : index
    %c0_47 = arith.constant 0 : index
    %227 = vector.load %arg2[%c23, %c0_47] : memref<36x128xf32, #tpu.memory_space<vmem>>, vector<1x128xf32>
    %228 = vector.shape_cast %227 : vector<1x128xf32> to vector<128xf32>
    %229 = vector.shape_cast %228 : vector<128xf32> to vector<1x128xf32>
    %230 = vector.broadcast %229 : vector<1x128xf32> to vector<16x128xf32>
    %231 = arith.mulf %211, %230 : vector<16x128xf32>
    %232 = arith.addf %226, %231 : vector<16x128xf32>
    %c7 = arith.constant 7 : index
    %c0_48 = arith.constant 0 : index
    %233 = vector.load %arg2[%c7, %c0_48] : memref<36x128xf32, #tpu.memory_space<vmem>>, vector<1x128xf32>
    %234 = vector.shape_cast %233 : vector<1x128xf32> to vector<128xf32>
    %235 = vector.shape_cast %234 : vector<128xf32> to vector<1x128xf32>
    %236 = vector.broadcast %235 : vector<1x128xf32> to vector<16x128xf32>
    %237 = arith.mulf %212, %236 : vector<16x128xf32>
    %238 = arith.addf %178, %237 : vector<16x128xf32>
    %c31 = arith.constant 31 : index
    %c0_49 = arith.constant 0 : index
    %239 = vector.load %arg2[%c31, %c0_49] : memref<36x128xf32, #tpu.memory_space<vmem>>, vector<1x128xf32>
    %240 = vector.shape_cast %239 : vector<1x128xf32> to vector<128xf32>
    %241 = vector.shape_cast %240 : vector<128xf32> to vector<1x128xf32>
    %242 = vector.broadcast %241 : vector<1x128xf32> to vector<16x128xf32>
    %243 = arith.mulf %211, %242 : vector<16x128xf32>
    %244 = arith.addf %238, %243 : vector<16x128xf32>
    %c3_50 = arith.constant 3 : index
    %c0_51 = arith.constant 0 : index
    %245 = vector.load %arg2[%c3_50, %c0_51] : memref<36x128xf32, #tpu.memory_space<vmem>>, vector<1x128xf32>
    %246 = vector.shape_cast %245 : vector<1x128xf32> to vector<128xf32>
    %247 = vector.shape_cast %246 : vector<128xf32> to vector<1x128xf32>
    %248 = vector.broadcast %247 : vector<1x128xf32> to vector<16x128xf32>
    %249 = arith.mulf %214, %248 : vector<16x128xf32>
    %250 = arith.addf %202, %249 : vector<16x128xf32>
    %c11 = arith.constant 11 : index
    %c0_52 = arith.constant 0 : index
    %251 = vector.load %arg2[%c11, %c0_52] : memref<36x128xf32, #tpu.memory_space<vmem>>, vector<1x128xf32>
    %252 = vector.shape_cast %251 : vector<1x128xf32> to vector<128xf32>
    %253 = vector.shape_cast %252 : vector<128xf32> to vector<1x128xf32>
    %254 = vector.broadcast %253 : vector<1x128xf32> to vector<16x128xf32>
    %255 = arith.mulf %212, %254 : vector<16x128xf32>
    %256 = arith.addf %250, %255 : vector<16x128xf32>
    %c27 = arith.constant 27 : index
    %c0_53 = arith.constant 0 : index
    %257 = vector.load %arg2[%c27, %c0_53] : memref<36x128xf32, #tpu.memory_space<vmem>>, vector<1x128xf32>
    %258 = vector.shape_cast %257 : vector<1x128xf32> to vector<128xf32>
    %259 = vector.shape_cast %258 : vector<128xf32> to vector<1x128xf32>
    %260 = vector.broadcast %259 : vector<1x128xf32> to vector<16x128xf32>
    %261 = arith.mulf %213, %260 : vector<16x128xf32>
    %262 = arith.addf %256, %261 : vector<16x128xf32>
    %c35 = arith.constant 35 : index
    %c0_54 = arith.constant 0 : index
    %263 = vector.load %arg2[%c35, %c0_54] : memref<36x128xf32, #tpu.memory_space<vmem>>, vector<1x128xf32>
    %264 = vector.shape_cast %263 : vector<1x128xf32> to vector<128xf32>
    %265 = vector.shape_cast %264 : vector<128xf32> to vector<1x128xf32>
    %266 = vector.broadcast %265 : vector<1x128xf32> to vector<16x128xf32>
    %267 = arith.mulf %211, %266 : vector<16x128xf32>
    %268 = arith.addf %262, %267 : vector<16x128xf32>
    %cst_55 = arith.constant 0.000000e+00 : f32
    %269 = vector.broadcast %cst_55 : f32 to vector<16x128xf32>
    %270 = arith.maximumf %220, %269 : vector<16x128xf32>
    %c0_56 = arith.constant 0 : index
    %c0_57 = arith.constant 0 : index
    %c0_58 = arith.constant 0 : index
    %c0_59 = arith.constant 0 : index
    %c0_60 = arith.constant 0 : index
    %271 = vector.load %arg4[%c0_56, %c0_57, %c0_58, %c0_59, %c0_60] : memref<1x2x2x16x128xf32, #tpu.memory_space<vmem>>, vector<1x1x1x16x128xf32>
    %272 = vector.shape_cast %271 : vector<1x1x1x16x128xf32> to vector<16x128xf32>
    %273 = vector.shape_cast %270 : vector<16x128xf32> to vector<1x1x1x16x128xf32>
    tpu.vector_store %arg4[%c0_56, %c0_57, %c0_58, %c0_59, %c0_60], %273 {strides = array<i32>} : memref<1x2x2x16x128xf32, #tpu.memory_space<vmem>>, vector<1x1x1x16x128xf32>,
    %cst_61 = arith.constant 0.000000e+00 : f32
    %274 = vector.broadcast %cst_61 : f32 to vector<16x128xf32>
    %275 = arith.maximumf %232, %274 : vector<16x128xf32>
    %c0_62 = arith.constant 0 : index
    %c0_63 = arith.constant 0 : index
    %c1_64 = arith.constant 1 : index
    %c0_65 = arith.constant 0 : index
    %c0_66 = arith.constant 0 : index
    %276 = vector.load %arg4[%c0_62, %c0_63, %c1_64, %c0_65, %c0_66] : memref<1x2x2x16x128xf32, #tpu.memory_space<vmem>>, vector<1x1x1x16x128xf32>
    %277 = vector.shape_cast %276 : vector<1x1x1x16x128xf32> to vector<16x128xf32>
    %278 = vector.shape_cast %275 : vector<16x128xf32> to vector<1x1x1x16x128xf32>
    tpu.vector_store %arg4[%c0_62, %c0_63, %c1_64, %c0_65, %c0_66], %278 {strides = array<i32>} : memref<1x2x2x16x128xf32, #tpu.memory_space<vmem>>, vector<1x1x1x16x128xf32>,
    %cst_67 = arith.constant 0.000000e+00 : f32
    %279 = vector.broadcast %cst_67 : f32 to vector<16x128xf32>
    %280 = arith.maximumf %244, %279 : vector<16x128xf32>
    %c0_68 = arith.constant 0 : index
    %c1_69 = arith.constant 1 : index
    %c0_70 = arith.constant 0 : index
    %c0_71 = arith.constant 0 : index
    %c0_72 = arith.constant 0 : index
    %281 = vector.load %arg4[%c0_68, %c1_69, %c0_70, %c0_71, %c0_72] : memref<1x2x2x16x128xf32, #tpu.memory_space<vmem>>, vector<1x1x1x16x128xf32>
    %282 = vector.shape_cast %281 : vector<1x1x1x16x128xf32> to vector<16x128xf32>
    %283 = vector.shape_cast %280 : vector<16x128xf32> to vector<1x1x1x16x128xf32>
    tpu.vector_store %arg4[%c0_68, %c1_69, %c0_70, %c0_71, %c0_72], %283 {strides = array<i32>} : memref<1x2x2x16x128xf32, #tpu.memory_space<vmem>>, vector<1x1x1x16x128xf32>,
    %cst_73 = arith.constant 0.000000e+00 : f32
    %284 = vector.broadcast %cst_73 : f32 to vector<16x128xf32>
    %285 = arith.maximumf %268, %284 : vector<16x128xf32>
    %c0_74 = arith.constant 0 : index
    %c1_75 = arith.constant 1 : index
    %c1_76 = arith.constant 1 : index
    %c0_77 = arith.constant 0 : index
    %c0_78 = arith.constant 0 : index
    %286 = vector.load %arg4[%c0_74, %c1_75, %c1_76, %c0_77, %c0_78] : memref<1x2x2x16x128xf32, #tpu.memory_space<vmem>>, vector<1x1x1x16x128xf32>
    %287 = vector.shape_cast %286 : vector<1x1x1x16x128xf32> to vector<16x128xf32>
    %288 = vector.shape_cast %285 : vector<16x128xf32> to vector<1x1x1x16x128xf32>
    tpu.vector_store %arg4[%c0_74, %c1_75, %c1_76, %c0_77, %c0_78], %288 {strides = array<i32>} : memref<1x2x2x16x128xf32, #tpu.memory_space<vmem>>, vector<1x1x1x16x128xf32>,
    return
  }
  func.func @transform_0(%arg0: i32) -> (i32, i32, i32, i32) {
    %c0_i32 = arith.constant 0 : i32
    %c0_i32_0 = arith.constant 0 : i32
    %c0_i32_1 = arith.constant 0 : i32
    %c0_i32_2 = arith.constant 0 : i32
    return %arg0, %c0_i32, %c0_i32_0, %c0_i32_1 : i32, i32, i32, i32
  }
  func.func @transform_1(%arg0: i32) -> (i32, i32) {
    %c0_i32 = arith.constant 0 : i32
    %c0_i32_0 = arith.constant 0 : i32
    %c0_i32_1 = arith.constant 0 : i32
    return %c0_i32, %c0_i32_0 : i32, i32
  }
  func.func @transform_2(%arg0: i32) -> (i32, i32) {
    %c0_i32 = arith.constant 0 : i32
    %c0_i32_0 = arith.constant 0 : i32
    %c0_i32_1 = arith.constant 0 : i32
    return %c0_i32, %c0_i32_0 : i32, i32
  }
  func.func @transform_3(%arg0: i32) -> (i32, i32, i32, i32, i32) {
    %c0_i32 = arith.constant 0 : i32
    %c0_i32_0 = arith.constant 0 : i32
    %c0_i32_1 = arith.constant 0 : i32
    %c0_i32_2 = arith.constant 0 : i32
    %c0_i32_3 = arith.constant 0 : i32
    return %arg0, %c0_i32, %c0_i32_0, %c0_i32_1, %c0_i32_2 : i32, i32, i32, i32, i32
  }
}

</mosaic_0001>

<llo_original>
// kernel: up_deconv_forward.1
$region0: #{up_deconv_forward.1}
  #allocation0 [shape = 'u32[]', space=smem, size = 0x4, offset = 0x4, fixed_abs, tag = 'smem constant byte address 0x4 - core index']
  #allocation1 [shape = 'u32[144,128]{1,0:T(1,128)}', space=vmem, size = 0x12000, scoped, tag = 'internal scratch']
  %s0 = inlined_call_operand.vmem [shape: f32[2,4,16,16], index: 0, kind: input, shape index: {}]
  %s1 = inlined_call_operand.vmem [shape: f32[36,128], index: 1, kind: input, shape index: {}]
  %s2 = inlined_call_operand.vmem [shape: f32[1,128], index: 2, kind: input, shape index: {}]
  %s3 = inlined_call_operand.vmem [shape: f32[2,2,2,16,128], index: 3, kind: output, shape index: {}]
  %s4 = sld [smem:[#allocation0]]
  $region45: #{up_deconv_forward.1} parent=0
    _
  %s6 = ssub.s32 1, %s4
  %s7 = scalar_select 0, %s6, %s4
  loop: start=0, step=1, limit=4
  $region2: #{up_deconv_forward.1} parent=0 // loop_pre_header
    _
  $region3: #{up_deconv_forward.1} parent=0 // loop_header
    %s9 = sphi 0, %s13
    %p10 = scmp.ge.s32.totalorder %s9, 4
    %s19 = sphi 0, %s21
    %s22 = sphi 0, %s19
    %s23 = sphi 0, %s22
    %s39 = sphi 0, %s23
    %s43 = sphi 0, %s43
    %s45 = sphi 0, %s43
    %s46 = sphi 0, %s45
    %s60 = sphi 0, %s46
    %s64 = sphi 0, %s64
    %s66 = sphi 0, %s64
    %s67 = sphi 0, %s66
    %s81 = sphi 0, %s67
    %s87 = sphi 0, %s89
    %s90 = sphi 0, %s87
    %s91 = sphi 0, %s90
    %s107 = sphi 0, %s91
  $region4: #{up_deconv_forward.1} parent=0 // loop_header_branch
    %12 = sbr.rel (%p10) target = $region8
  $region5: #{up_deconv_forward.1} parent=0 // loop_body
    %s14 = ssub.s32 %s9, 1
    %s15 = ssub.s32 %s9, 2
    %s16 = sadd.s32 %s9, 1
    %s17 = ssub.s32 %s9, %s16
    %p18 = scmp.eq.s32.totalorder %s17, 0
    %s20 = sadd.s32 %s19, 1
    %s21 = scalar_select %p18, %s19, %s20
    %p24 = pneg %p18
    %p25 = scmp.eq.s32.totalorder %s9, 1
    %p26 = por %p24, %p25
    %p27 = scmp.ne.s32.totalorder %s19, %s22
    %p28 = scmp.eq.s32.totalorder %s9, 0
    %p29 = por %p27, %p28
    %p30 = scmp.ne.s32.totalorder %s19, %s22
    %p31 = scmp.eq.s32.totalorder %s14, 1
    %p32 = por %p30, %p31
    %p33 = scmp.ne.s32.totalorder %s22, %s23
    %p34 = scmp.eq.s32.totalorder %s14, 0
    %p35 = por %p33, %p34
    %p36 = scmp.ne.s32.totalorder %s22, %s23
    %p37 = scmp.eq.s32.totalorder %s15, 1
    %p38 = por %p36, %p37
    %p40 = scmp.ne.s32.totalorder %s23, %s39
    %p41 = scmp.eq.s32.totalorder %s15, 0
    %p42 = por %p40, %p41
    %s44 = sadd.s32 %s43, 1
    %p47 = scmp.eq.s32.totalorder %s9, 1
    %p48 = scmp.ne.s32.totalorder %s43, %s45
    %p49 = scmp.eq.s32.totalorder %s9, 0
    %p50 = por %p48, %p49
    %p51 = scmp.ne.s32.totalorder %s43, %s45
    %p52 = scmp.eq.s32.totalorder %s14, 1
    %p53 = por %p51, %p52
    %p54 = scmp.ne.s32.totalorder %s45, %s46
    %p55 = scmp.eq.s32.totalorder %s14, 0
    %p56 = por %p54, %p55
    %p57 = scmp.ne.s32.totalorder %s45, %s46
    %p58 = scmp.eq.s32.totalorder %s15, 1
    %p59 = por %p57, %p58
    %p61 = scmp.ne.s32.totalorder %s46, %s60
    %p62 = scmp.eq.s32.totalorder %s15, 0
    %p63 = por %p61, %p62
    %s65 = sadd.s32 %s64, 1
    %p68 = scmp.eq.s32.totalorder %s9, 1
    %p69 = scmp.ne.s32.totalorder %s64, %s66
    %p70 = scmp.eq.s32.totalorder %s9, 0
    %p71 = por %p69, %p70
    %p72 = scmp.ne.s32.totalorder %s64, %s66
    %p73 = scmp.eq.s32.totalorder %s14, 1
    %p74 = por %p72, %p73
    %p75 = scmp.ne.s32.totalorder %s66, %s67
    %p76 = scmp.eq.s32.totalorder %s14, 0
    %p77 = por %p75, %p76
    %p78 = scmp.ne.s32.totalorder %s66, %s67
    %p79 = scmp.eq.s32.totalorder %s15, 1
    %p80 = por %p78, %p79
    %p82 = scmp.ne.s32.totalorder %s67, %s81
    %p83 = scmp.eq.s32.totalorder %s15, 0
    %p84 = por %p82, %p83
    %s85 = ssub.s32 %s9, %s16
    %p86 = scmp.eq.s32.totalorder %s85, 0
    %s88 = sadd.s32 %s87, 1
    %s89 = scalar_select %p86, %s87, %s88
    %p92 = pneg %p86
    %p93 = scmp.eq.s32.totalorder %s9, 1
    %p94 = por %p92, %p93
    %p95 = scmp.ne.s32.totalorder %s87, %s90
    %p96 = scmp.eq.s32.totalorder %s9, 0
    %p97 = por %p95, %p96
    %p98 = scmp.ne.s32.totalorder %s87, %s90
    %p99 = scmp.eq.s32.totalorder %s14, 1
    %p100 = por %p98, %p99
    %p101 = scmp.ne.s32.totalorder %s90, %s91
    %p102 = scmp.eq.s32.totalorder %s14, 0
    %p103 = por %p101, %p102
    %p104 = scmp.ne.s32.totalorder %s90, %s91
    %p105 = scmp.eq.s32.totalorder %s15, 1
    %p106 = por %p104, %p105
    %p108 = scmp.ne.s32.totalorder %s91, %s107
    %p109 = scmp.eq.s32.totalorder %s15, 0
    %p110 = por %p108, %p109
    %p111 = scmp.le.s32.totalorder 1, %s9
    %p112 = scmp.lt.s32.totalorder %s9, 3
    %p113 = pnand %p111, %p112
    %p114 = pneg %p113
    // Predicated region
    $region9: #{up_deconv_forward.1} parent=5 // pred_check
      _
    $region10: #{up_deconv_forward.1} parent=5 // pred_check_branch
      %116 = sbr.rel (%p113) target = $region12
    $region11: #{up_deconv_forward.1} parent=5 // pred_region
      %s117 = ssub.s32 %s9, 1
      // Predicated region
      $region13: #{up_deconv_forward.1} parent=11 // pred_check
        %p118 = pneg %p56
      $region14: #{up_deconv_forward.1} parent=11 // pred_check_branch
        %120 = sbr.rel (%p118) target = $region16
      $region15: #{up_deconv_forward.1} parent=11 // pred_region
        _
      $region16: #{up_deconv_forward.1} parent=11 // pred_fallthru
        _
      // Predicated region
      $region17: #{up_deconv_forward.1} parent=11 // pred_check
        %p121 = pneg %p77
      $region18: #{up_deconv_forward.1} parent=11 // pred_check_branch
        %123 = sbr.rel (%p121) target = $region20
      $region19: #{up_deconv_forward.1} parent=11 // pred_region
        _
      $region20: #{up_deconv_forward.1} parent=11 // pred_fallthru
        _
    $region12: #{up_deconv_forward.1} parent=5 // pred_fallthru
      _
    %p124 = scmp.lt.s32.totalorder %s9, 2
    // Predicated region
    $region21: #{up_deconv_forward.1} parent=5 // pred_check
      %p125 = pneg %p124
    $region22: #{up_deconv_forward.1} parent=5 // pred_check_branch
      %127 = sbr.rel (%p125) target = $region24
    $region23: #{up_deconv_forward.1} parent=5 // pred_region
      // Predicated region
      $region25: #{up_deconv_forward.1} parent=23 // pred_check
        %p128 = pneg %p29
      $region26: #{up_deconv_forward.1} parent=23 // pred_check_branch
        %130 = sbr.rel (%p128) target = $region28
      $region27: #{up_deconv_forward.1} parent=23 // pred_region
        %p131 = scmp.lt.s32.totalorder %s9, 1
        %s132 = scalar_select %p131, %s9, 1
        %s133 = smul.addr %s132, 8
        %s134 = smul.addr %s133, 8
        %s135 = scalar_lea.vmem %s0, %s134
      $region28: #{up_deconv_forward.1} parent=23 // pred_fallthru
        _
    $region24: #{up_deconv_forward.1} parent=5 // pred_fallthru
      _
    %p136 = scmp.le.s32.totalorder 1, %s9
    %p137 = scmp.lt.s32.totalorder %s9, 3
    %p138 = pnand %p136, %p137
    %p139 = pneg %p138
    // Predicated region
    $region29: #{up_deconv_forward.1} parent=5 // pred_check
      _
    $region30: #{up_deconv_forward.1} parent=5 // pred_check_branch
      %141 = sbr.rel (%p138) target = $region32
    $region31: #{up_deconv_forward.1} parent=5 // pred_region
      %s142 = ssub.s32 %s9, 1
      %p143 = scmp.lt.s32.totalorder %s14, 1
      %s144 = scalar_select %p143, %s14, 1
      %s145 = smul.addr %s144, 8
      %s146 = smul.addr %s145, 8
      %s147 = scalar_lea.vmem %s0, %s146
      %p148 = pneg %p35
      %p149 = pneg %p32
      %p150 = pneg %p56
      %p151 = pneg %p53
      %p152 = pneg %p77
      %p153 = pneg %p74
      %p154 = pneg %p103
      %p155 = pneg %p100
      %p156 = scmp.lt.s32.totalorder %s14, 1
      %s157 = scalar_select %p156, %s14, 1
      %s158 = smul.addr %s157, 8
      %s159 = smul.addr %s158, 8
      %s160 = scalar_lea.vmem %s3, %s159
      %p161 = scmp.lt.s32.totalorder %s14, 1
      %s162 = scalar_select %p161, %s14, 1
      %s163 = smul.addr %s162, 8
      %s164 = smul.addr %s163, 8
      %s165 = scalar_lea.vmem %s0, %s164
      %p166 = scmp.lt.s32.totalorder %s14, 1
      %s167 = scalar_select %p166, %s14, 1
      %s168 = smul.addr %s167, 8
      %s169 = smul.addr %s168, 8
      %s170 = scalar_lea.vmem %s3, %s169
      %v171 = vld [vmem:[%s2] sm:$0x1]
      %v173 = vlaneseq
      %v174 = vshrl.u32 %v173, 7
      %v175 = vsub.s32 0, %v174
      %v176 = vrot.slane %v171, %v175
      %v178 = vld [vmem:[%s165] sm:$0xff]
      %v179 = vld [vmem:[%s165 + $0x8] sm:$0xff]
      %vm182 = vcmask 1046528
      %v183 = vrot.slane %v178, 1
      %v184 = vrot.slane %v179, 1
      %v185 = vsel %vm182, %v183, %v184
      %v188 = vsel %vm182, %v184, 0.0
      %189 = vrot.lane.b32.xlu0 %v178, 127
      %v190 = vpop.permute.xlu0 %189
      %191 = vrot.lane.b32.xlu0 %v179, 127
      %v192 = vpop.permute.xlu0 %191
      %vm195 = vcmask 121856
      %v196 = vsel %vm195, %v190, 0.0
      %v197 = vsel %vm195, %v192, 0.0
      %199 = vrot.lane.b32.xlu0 %v185, 127
      %v200 = vpop.permute.xlu0 %199
      %201 = vrot.lane.b32.xlu0 %v188, 127
      %v202 = vpop.permute.xlu0 %201
      %v205 = vsel %vm195, %v200, 0.0
      %v206 = vsel %vm195, %v202, 0.0
      %207 = vrot.lane.b32.xlu0 %v178, 16
      %v208 = vpop.permute.xlu0 %207
      %209 = vrot.lane.b32.xlu0 %v179, 16
      %v210 = vpop.permute.xlu0 %209
      %213 = vrot.lane.b32.xlu0 %v178, 32
      %v214 = vpop.permute.xlu0 %213
      %215 = vrot.lane.b32.xlu0 %v179, 32
      %v216 = vpop.permute.xlu0 %215
      %219 = vrot.lane.b32.xlu0 %v178, 48
      %v220 = vpop.permute.xlu0 %219
      %221 = vrot.lane.b32.xlu0 %v179, 48
      %v222 = vpop.permute.xlu0 %221
      %225 = vrot.lane.b32.xlu0 %v178, 64
      %v226 = vpop.permute.xlu0 %225
      %227 = vrot.lane.b32.xlu0 %v179, 64
      %v228 = vpop.permute.xlu0 %227
      %231 = vrot.lane.b32.xlu0 %v178, 80
      %v232 = vpop.permute.xlu0 %231
      %233 = vrot.lane.b32.xlu0 %v179, 80
      %v234 = vpop.permute.xlu0 %233
      %237 = vrot.lane.b32.xlu0 %v178, 96
      %v238 = vpop.permute.xlu0 %237
      %239 = vrot.lane.b32.xlu0 %v179, 96
      %v240 = vpop.permute.xlu0 %239
      %243 = vrot.lane.b32.xlu0 %v178, 112
      %v244 = vpop.permute.xlu0 %243
      %245 = vrot.lane.b32.xlu0 %v179, 112
      %v246 = vpop.permute.xlu0 %245
      %vm249 = vcmask 130048
      %v250 = vsel %vm249, %v178, %v208
      %v251 = vsel %vm249, %v179, %v210
      %vm252 = vcmask 261120
      %v253 = vsel %vm252, %v250, %v214
      %v254 = vsel %vm252, %v251, %v216
      %vm255 = vcmask 392192
      %v256 = vsel %vm255, %v253, %v220
      %v257 = vsel %vm255, %v254, %v222
      %vm258 = vcmask 523264
      %v259 = vsel %vm258, %v256, %v226
      %v260 = vsel %vm258, %v257, %v228
      %vm261 = vcmask 654336
      %v262 = vsel %vm261, %v259, %v232
      %v263 = vsel %vm261, %v260, %v234
      %vm264 = vcmask 785408
      %v265 = vsel %vm264, %v262, %v238
      %v266 = vsel %vm264, %v263, %v240
      %vm267 = vcmask 916480
      %v268 = vsel %vm267, %v265, %v244
      %v269 = vsel %vm267, %v266, %v246
      %270 = vrot.lane.b32.xlu0 %v185, 16
      %v271 = vpop.permute.xlu0 %270
      %272 = vrot.lane.b32.xlu0 %v188, 16
      %v273 = vpop.permute.xlu0 %272
      %276 = vrot.lane.b32.xlu0 %v185, 32
      %v277 = vpop.permute.xlu0 %276
      %278 = vrot.lane.b32.xlu0 %v188, 32
      %v279 = vpop.permute.xlu0 %278
      %282 = vrot.lane.b32.xlu0 %v185, 48
      %v283 = vpop.permute.xlu0 %282
      %284 = vrot.lane.b32.xlu0 %v188, 48
      %v285 = vpop.permute.xlu0 %284
      %288 = vrot.lane.b32.xlu0 %v185, 64
      %v289 = vpop.permute.xlu0 %288
      %290 = vrot.lane.b32.xlu0 %v188, 64
      %v291 = vpop.permute.xlu0 %290
      %294 = vrot.lane.b32.xlu0 %v185, 80
      %v295 = vpop.permute.xlu0 %294
      %296 = vrot.lane.b32.xlu0 %v188, 80
      %v297 = vpop.permute.xlu0 %296
      %300 = vrot.lane.b32.xlu0 %v185, 96
      %v301 = vpop.permute.xlu0 %300
      %302 = vrot.lane.b32.xlu0 %v188, 96
      %v303 = vpop.permute.xlu0 %302
      %306 = vrot.lane.b32.xlu0 %v185, 112
      %v307 = vpop.permute.xlu0 %306
      %308 = vrot.lane.b32.xlu0 %v188, 112
      %v309 = vpop.permute.xlu0 %308
      %v312 = vsel %vm249, %v185, %v271
      %v313 = vsel %vm249, %v188, %v273
      %v314 = vsel %vm252, %v312, %v277
      %v315 = vsel %vm252, %v313, %v279
      %v316 = vsel %vm255, %v314, %v283
      %v317 = vsel %vm255, %v315, %v285
      %v318 = vsel %vm258, %v316, %v289
      %v319 = vsel %vm258, %v317, %v291
      %v320 = vsel %vm261, %v318, %v295
      %v321 = vsel %vm261, %v319, %v297
      %v322 = vsel %vm264, %v320, %v301
      %v323 = vsel %vm264, %v321, %v303
      %v324 = vsel %vm267, %v322, %v307
      %v325 = vsel %vm267, %v323, %v309
      %328 = vrot.lane.b32.xlu0 %v196, 16
      %v329 = vpop.permute.xlu0 %328
      %330 = vrot.lane.b32.xlu0 %v197, 16
      %v331 = vpop.permute.xlu0 %330
      %334 = vrot.lane.b32.xlu0 %v196, 32
      %v335 = vpop.permute.xlu0 %334
      %336 = vrot.lane.b32.xlu0 %v197, 32
      %v337 = vpop.permute.xlu0 %336
      %340 = vrot.lane.b32.xlu0 %v196, 48
      %v341 = vpop.permute.xlu0 %340
      %342 = vrot.lane.b32.xlu0 %v197, 48
      %v343 = vpop.permute.xlu0 %342
      %346 = vrot.lane.b32.xlu0 %v196, 64
      %v347 = vpop.permute.xlu0 %346
      %348 = vrot.lane.b32.xlu0 %v197, 64
      %v349 = vpop.permute.xlu0 %348
      %352 = vrot.lane.b32.xlu0 %v196, 80
      %v353 = vpop.permute.xlu0 %352
      %354 = vrot.lane.b32.xlu0 %v197, 80
      %v355 = vpop.permute.xlu0 %354
      %358 = vrot.lane.b32.xlu0 %v196, 96
      %v359 = vpop.permute.xlu0 %358
      %360 = vrot.lane.b32.xlu0 %v197, 96
      %v361 = vpop.permute.xlu0 %360
      %364 = vrot.lane.b32.xlu0 %v196, 112
      %v365 = vpop.permute.xlu0 %364
      %366 = vrot.lane.b32.xlu0 %v197, 112
      %v367 = vpop.permute.xlu0 %366
      %v370 = vsel %vm249, %v196, %v329
      %v371 = vsel %vm249, %v197, %v331
      %v372 = vsel %vm252, %v370, %v335
      %v373 = vsel %vm252, %v371, %v337
      %v374 = vsel %vm255, %v372, %v341
      %v375 = vsel %vm255, %v373, %v343
      %v376 = vsel %vm258, %v374, %v347
      %v377 = vsel %vm258, %v375, %v349
      %v378 = vsel %vm261, %v376, %v353
      %v379 = vsel %vm261, %v377, %v355
      %v380 = vsel %vm264, %v378, %v359
      %v381 = vsel %vm264, %v379, %v361
      %v382 = vsel %vm267, %v380, %v365
      %v383 = vsel %vm267, %v381, %v367
      %386 = vrot.lane.b32.xlu0 %v205, 16
      %v387 = vpop.permute.xlu0 %386
      %388 = vrot.lane.b32.xlu0 %v206, 16
      %v389 = vpop.permute.xlu0 %388
      %392 = vrot.lane.b32.xlu0 %v205, 32
      %v393 = vpop.permute.xlu0 %392
      %394 = vrot.lane.b32.xlu0 %v206, 32
      %v395 = vpop.permute.xlu0 %394
      %398 = vrot.lane.b32.xlu0 %v205, 48
      %v399 = vpop.permute.xlu0 %398
      %400 = vrot.lane.b32.xlu0 %v206, 48
      %v401 = vpop.permute.xlu0 %400
      %404 = vrot.lane.b32.xlu0 %v205, 64
      %v405 = vpop.permute.xlu0 %404
      %406 = vrot.lane.b32.xlu0 %v206, 64
      %v407 = vpop.permute.xlu0 %406
      %410 = vrot.lane.b32.xlu0 %v205, 80
      %v411 = vpop.permute.xlu0 %410
      %412 = vrot.lane.b32.xlu0 %v206, 80
      %v413 = vpop.permute.xlu0 %412
      %416 = vrot.lane.b32.xlu0 %v205, 96
      %v417 = vpop.permute.xlu0 %416
      %418 = vrot.lane.b32.xlu0 %v206, 96
      %v419 = vpop.permute.xlu0 %418
      %422 = vrot.lane.b32.xlu0 %v205, 112
      %v423 = vpop.permute.xlu0 %422
      %424 = vrot.lane.b32.xlu0 %v206, 112
      %v425 = vpop.permute.xlu0 %424
      %v428 = vsel %vm249, %v205, %v387
      %v429 = vsel %vm249, %v206, %v389
      %v430 = vsel %vm252, %v428, %v393
      %v431 = vsel %vm252, %v429, %v395
      %v432 = vsel %vm255, %v430, %v399
      %v433 = vsel %vm255, %v431, %v401
      %v434 = vsel %vm258, %v432, %v405
      %v435 = vsel %vm258, %v433, %v407
      %v436 = vsel %vm261, %v434, %v411
      %v437 = vsel %vm261, %v435, %v413
      %v438 = vsel %vm264, %v436, %v417
      %v439 = vsel %vm264, %v437, %v419
      %v440 = vsel %vm267, %v438, %v423
      %v441 = vsel %vm267, %v439, %v425
      %v442 = vld [vmem:[%s1 + $0x10] sm:$0x1]
      %v443 = vlaneseq
      %v444 = vshrl.u32 %v443, 7
      %v445 = vsub.s32 0, %v444
      %v446 = vrot.slane %v442, %v445
      %v447 = vmul.f32 %v268, %v446
      %v448 = vmul.f32 %v269, %v446
      %v449 = vadd.f32 %v176, %v447
      %v450 = vadd.f32 %v176, %v448
      %v451 = vld [vmem:[%s1 + $0xc] sm:$0x1]
      %v452 = vlaneseq
      %v453 = vshrl.u32 %v452, 7
      %v454 = vsub.s32 0, %v453
      %v455 = vrot.slane %v451, %v454
      %v456 = vmul.f32 %v382, %v455
      %v457 = vmul.f32 %v383, %v455
      %v458 = vadd.f32 %v176, %v456
      %v459 = vadd.f32 %v176, %v457
      %v460 = vld [vmem:[%s1 + $0x14] sm:$0x1]
      %v461 = vlaneseq
      %v462 = vshrl.u32 %v461, 7
      %v463 = vsub.s32 0, %v462
      %v464 = vrot.slane %v460, %v463
      %v465 = vmul.f32 %v268, %v464
      %v466 = vmul.f32 %v269, %v464
      %v467 = vadd.f32 %v458, %v465
      %v468 = vadd.f32 %v459, %v466
      %v469 = vld [vmem:[%s1 + $0x4] sm:$0x1]
      %v470 = vlaneseq
      %v471 = vshrl.u32 %v470, 7
      %v472 = vsub.s32 0, %v471
      %v473 = vrot.slane %v469, %v472
      %v474 = vmul.f32 %v324, %v473
      %v475 = vmul.f32 %v325, %v473
      %v476 = vadd.f32 %v176, %v474
      %v477 = vadd.f32 %v176, %v475
      %v478 = vld [vmem:[%s1 + $0x1c] sm:$0x1]
      %v479 = vlaneseq
      %v480 = vshrl.u32 %v479, 7
      %v481 = vsub.s32 0, %v480
      %v482 = vrot.slane %v478, %v481
      %v483 = vmul.f32 %v268, %v482
      %v484 = vmul.f32 %v269, %v482
      %v485 = vadd.f32 %v476, %v483
      %v486 = vadd.f32 %v477, %v484
      %v487 = vld [vmem:[%s1] sm:$0x1]
      %v488 = vlaneseq
      %v489 = vshrl.u32 %v488, 7
      %v490 = vsub.s32 0, %v489
      %v491 = vrot.slane %v487, %v490
      %v492 = vmul.f32 %v440, %v491
      %v493 = vmul.f32 %v441, %v491
      %v494 = vadd.f32 %v176, %v492
      %v495 = vadd.f32 %v176, %v493
      %v496 = vld [vmem:[%s1 + $0x8] sm:$0x1]
      %v497 = vlaneseq
      %v498 = vshrl.u32 %v497, 7
      %v499 = vsub.s32 0, %v498
      %v500 = vrot.slane %v496, %v499
      %v501 = vmul.f32 %v324, %v500
      %v502 = vmul.f32 %v325, %v500
      %v503 = vadd.f32 %v494, %v501
      %v504 = vadd.f32 %v495, %v502
      %v505 = vld [vmem:[%s1 + $0x18] sm:$0x1]
      %v506 = vlaneseq
      %v507 = vshrl.u32 %v506, 7
      %v508 = vsub.s32 0, %v507
      %v509 = vrot.slane %v505, %v508
      %v510 = vmul.f32 %v382, %v509
      %v511 = vmul.f32 %v383, %v509
      %v512 = vadd.f32 %v503, %v510
      %v513 = vadd.f32 %v504, %v511
      %v514 = vld [vmem:[%s1 + $0x20] sm:$0x1]
      %v515 = vlaneseq
      %v516 = vshrl.u32 %v515, 7
      %v517 = vsub.s32 0, %v516
      %v518 = vrot.slane %v514, %v517
      %v519 = vmul.f32 %v268, %v518
      %v520 = vmul.f32 %v269, %v518
      %v521 = vadd.f32 %v512, %v519
      %v522 = vadd.f32 %v513, %v520
      %s523 = scalar_lea.vmem %s165, 16
      %v524 = vld [vmem:[%s523] sm:$0xff]
      %v525 = vld [vmem:[%s523 + $0x8] sm:$0xff]
      %v528 = vrot.slane %v524, 1
      %v529 = vrot.slane %v525, 1
      %v530 = vsel %vm182, %v528, %v529
      %v533 = vsel %vm182, %v529, 0.0
      %534 = vrot.lane.b32.xlu0 %v524, 127
      %v535 = vpop.permute.xlu0 %534
      %536 = vrot.lane.b32.xlu0 %v525, 127
      %v537 = vpop.permute.xlu0 %536
      %v540 = vsel %vm195, %v535, 0.0
      %v541 = vsel %vm195, %v537, 0.0
      %543 = vrot.lane.b32.xlu0 %v530, 127
      %v544 = vpop.permute.xlu0 %543
      %545 = vrot.lane.b32.xlu0 %v533, 127
      %v546 = vpop.permute.xlu0 %545
      %v549 = vsel %vm195, %v544, 0.0
      %v550 = vsel %vm195, %v546, 0.0
      %551 = vrot.lane.b32.xlu0 %v524, 16
      %v552 = vpop.permute.xlu0 %551
      %553 = vrot.lane.b32.xlu0 %v525, 16
      %v554 = vpop.permute.xlu0 %553
      %557 = vrot.lane.b32.xlu0 %v524, 32
      %v558 = vpop.permute.xlu0 %557
      %559 = vrot.lane.b32.xlu0 %v525, 32
      %v560 = vpop.permute.xlu0 %559
      %563 = vrot.lane.b32.xlu0 %v524, 48
      %v564 = vpop.permute.xlu0 %563
      %565 = vrot.lane.b32.xlu0 %v525, 48
      %v566 = vpop.permute.xlu0 %565
      %569 = vrot.lane.b32.xlu0 %v524, 64
      %v570 = vpop.permute.xlu0 %569
      %571 = vrot.lane.b32.xlu0 %v525, 64
      %v572 = vpop.permute.xlu0 %571
      %575 = vrot.lane.b32.xlu0 %v524, 80
      %v576 = vpop.permute.xlu0 %575
      %577 = vrot.lane.b32.xlu0 %v525, 80
      %v578 = vpop.permute.xlu0 %577
      %581 = vrot.lane.b32.xlu0 %v524, 96
      %v582 = vpop.permute.xlu0 %581
      %583 = vrot.lane.b32.xlu0 %v525, 96
      %v584 = vpop.permute.xlu0 %583
      %587 = vrot.lane.b32.xlu0 %v524, 112
      %v588 = vpop.permute.xlu0 %587
      %589 = vrot.lane.b32.xlu0 %v525, 112
      %v590 = vpop.permute.xlu0 %589
      %v593 = vsel %vm249, %v524, %v552
      %v594 = vsel %vm249, %v525, %v554
      %v595 = vsel %vm252, %v593, %v558
      %v596 = vsel %vm252, %v594, %v560
      %v597 = vsel %vm255, %v595, %v564
      %v598 = vsel %vm255, %v596, %v566
      %v599 = vsel %vm258, %v597, %v570
      %v600 = vsel %vm258, %v598, %v572
      %v601 = vsel %vm261, %v599, %v576
      %v602 = vsel %vm261, %v600, %v578
      %v603 = vsel %vm264, %v601, %v582
      %v604 = vsel %vm264, %v602, %v584
      %v605 = vsel %vm267, %v603, %v588
      %v606 = vsel %vm267, %v604, %v590
      %607 = vrot.lane.b32.xlu0 %v530, 16
      %v608 = vpop.permute.xlu0 %607
      %609 = vrot.lane.b32.xlu0 %v533, 16
      %v610 = vpop.permute.xlu0 %609
      %613 = vrot.lane.b32.xlu0 %v530, 32
      %v614 = vpop.permute.xlu0 %613
      %615 = vrot.lane.b32.xlu0 %v533, 32
      %v616 = vpop.permute.xlu0 %615
      %619 = vrot.lane.b32.xlu0 %v530, 48
      %v620 = vpop.permute.xlu0 %619
      %621 = vrot.lane.b32.xlu0 %v533, 48
      %v622 = vpop.permute.xlu0 %621
      %625 = vrot.lane.b32.xlu0 %v530, 64
      %v626 = vpop.permute.xlu0 %625
      %627 = vrot.lane.b32.xlu0 %v533, 64
      %v628 = vpop.permute.xlu0 %627
      %631 = vrot.lane.b32.xlu0 %v530, 80
      %v632 = vpop.permute.xlu0 %631
      %633 = vrot.lane.b32.xlu0 %v533, 80
      %v634 = vpop.permute.xlu0 %633
      %637 = vrot.lane.b32.xlu0 %v530, 96
      %v638 = vpop.permute.xlu0 %637
      %639 = vrot.lane.b32.xlu0 %v533, 96
      %v640 = vpop.permute.xlu0 %639
      %643 = vrot.lane.b32.xlu0 %v530, 112
      %v644 = vpop.permute.xlu0 %643
      %645 = vrot.lane.b32.xlu0 %v533, 112
      %v646 = vpop.permute.xlu0 %645
      %v649 = vsel %vm249, %v530, %v608
      %v650 = vsel %vm249, %v533, %v610
      %v651 = vsel %vm252, %v649, %v614
      %v652 = vsel %vm252, %v650, %v616
      %v653 = vsel %vm255, %v651, %v620
      %v654 = vsel %vm255, %v652, %v622
      %v655 = vsel %vm258, %v653, %v626
      %v656 = vsel %vm258, %v654, %v628
      %v657 = vsel %vm261, %v655, %v632
      %v658 = vsel %vm261, %v656, %v634
      %v659 = vsel %vm264, %v657, %v638
      %v660 = vsel %vm264, %v658, %v640
      %v661 = vsel %vm267, %v659, %v644
      %v662 = vsel %vm267, %v660, %v646
      %665 = vrot.lane.b32.xlu0 %v540, 16
      %v666 = vpop.permute.xlu0 %665
      %667 = vrot.lane.b32.xlu0 %v541, 16
      %v668 = vpop.permute.xlu0 %667
      %671 = vrot.lane.b32.xlu0 %v540, 32
      %v672 = vpop.permute.xlu0 %671
      %673 = vrot.lane.b32.xlu0 %v541, 32
      %v674 = vpop.permute.xlu0 %673
      %677 = vrot.lane.b32.xlu0 %v540, 48
      %v678 = vpop.permute.xlu0 %677
      %679 = vrot.lane.b32.xlu0 %v541, 48
      %v680 = vpop.permute.xlu0 %679
      %683 = vrot.lane.b32.xlu0 %v540, 64
      %v684 = vpop.permute.xlu0 %683
      %685 = vrot.lane.b32.xlu0 %v541, 64
      %v686 = vpop.permute.xlu0 %685
      %689 = vrot.lane.b32.xlu0 %v540, 80
      %v690 = vpop.permute.xlu0 %689
      %691 = vrot.lane.b32.xlu0 %v541, 80
      %v692 = vpop.permute.xlu0 %691
      %695 = vrot.lane.b32.xlu0 %v540, 96
      %v696 = vpop.permute.xlu0 %695
      %697 = vrot.lane.b32.xlu0 %v541, 96
      %v698 = vpop.permute.xlu0 %697
      %701 = vrot.lane.b32.xlu0 %v540, 112
      %v702 = vpop.permute.xlu0 %701
      %703 = vrot.lane.b32.xlu0 %v541, 112
      %v704 = vpop.permute.xlu0 %703
      %v707 = vsel %vm249, %v540, %v666
      %v708 = vsel %vm249, %v541, %v668
      %v709 = vsel %vm252, %v707, %v672
      %v710 = vsel %vm252, %v708, %v674
      %v711 = vsel %vm255, %v709, %v678
      %v712 = vsel %vm255, %v710, %v680
      %v713 = vsel %vm258, %v711, %v684
      %v714 = vsel %vm258, %v712, %v686
      %v715 = vsel %vm261, %v713, %v690
      %v716 = vsel %vm261, %v714, %v692
      %v717 = vsel %vm264, %v715, %v696
      %v718 = vsel %vm264, %v716, %v698
      %v719 = vsel %vm267, %v717, %v702
      %v720 = vsel %vm267, %v718, %v704
      %723 = vrot.lane.b32.xlu0 %v549, 16
      %v724 = vpop.permute.xlu0 %723
      %725 = vrot.lane.b32.xlu0 %v550, 16
      %v726 = vpop.permute.xlu0 %725
      %729 = vrot.lane.b32.xlu0 %v549, 32
      %v730 = vpop.permute.xlu0 %729
      %731 = vrot.lane.b32.xlu0 %v550, 32
      %v732 = vpop.permute.xlu0 %731
      %735 = vrot.lane.b32.xlu0 %v549, 48
      %v736 = vpop.permute.xlu0 %735
      %737 = vrot.lane.b32.xlu0 %v550, 48
      %v738 = vpop.permute.xlu0 %737
      %741 = vrot.lane.b32.xlu0 %v549, 64
      %v742 = vpop.permute.xlu0 %741
      %743 = vrot.lane.b32.xlu0 %v550, 64
      %v744 = vpop.permute.xlu0 %743
      %747 = vrot.lane.b32.xlu0 %v549, 80
      %v748 = vpop.permute.xlu0 %747
      %749 = vrot.lane.b32.xlu0 %v550, 80
      %v750 = vpop.permute.xlu0 %749
      %753 = vrot.lane.b32.xlu0 %v549, 96
      %v754 = vpop.permute.xlu0 %753
      %755 = vrot.lane.b32.xlu0 %v550, 96
      %v756 = vpop.permute.xlu0 %755
      %759 = vrot.lane.b32.xlu0 %v549, 112
      %v760 = vpop.permute.xlu0 %759
      %761 = vrot.lane.b32.xlu0 %v550, 112
      %v762 = vpop.permute.xlu0 %761
      %v765 = vsel %vm249, %v549, %v724
      %v766 = vsel %vm249, %v550, %v726
      %v767 = vsel %vm252, %v765, %v730
      %v768 = vsel %vm252, %v766, %v732
      %v769 = vsel %vm255, %v767, %v736
      %v770 = vsel %vm255, %v768, %v738
      %v771 = vsel %vm258, %v769, %v742
      %v772 = vsel %vm258, %v770, %v744
      %v773 = vsel %vm261, %v771, %v748
      %v774 = vsel %vm261, %v772, %v750
      %v775 = vsel %vm264, %v773, %v754
      %v776 = vsel %vm264, %v774, %v756
      %v777 = vsel %vm267, %v775, %v760
      %v778 = vsel %vm267, %v776, %v762
      %v779 = vld [vmem:[%s1 + $0x11] sm:$0x1]
      %v780 = vlaneseq
      %v781 = vshrl.u32 %v780, 7
      %v782 = vsub.s32 0, %v781
      %v783 = vrot.slane %v779, %v782
      %v784 = vmul.f32 %v605, %v783
      %v785 = vmul.f32 %v606, %v783
      %v786 = vadd.f32 %v449, %v784
      %v787 = vadd.f32 %v450, %v785
      %v788 = vld [vmem:[%s1 + $0xd] sm:$0x1]
      %v789 = vlaneseq
      %v790 = vshrl.u32 %v789, 7
      %v791 = vsub.s32 0, %v790
      %v792 = vrot.slane %v788, %v791
      %v793 = vmul.f32 %v719, %v792
      %v794 = vmul.f32 %v720, %v792
      %v795 = vadd.f32 %v467, %v793
      %v796 = vadd.f32 %v468, %v794
      %v797 = vld [vmem:[%s1 + $0x15] sm:$0x1]
      %v798 = vlaneseq
      %v799 = vshrl.u32 %v798, 7
      %v800 = vsub.s32 0, %v799
      %v801 = vrot.slane %v797, %v800
      %v802 = vmul.f32 %v605, %v801
      %v803 = vmul.f32 %v606, %v801
      %v804 = vadd.f32 %v795, %v802
      %v805 = vadd.f32 %v796, %v803
      %v806 = vld [vmem:[%s1 + $0x5] sm:$0x1]
      %v807 = vlaneseq
      %v808 = vshrl.u32 %v807, 7
      %v809 = vsub.s32 0, %v808
      %v810 = vrot.slane %v806, %v809
      %v811 = vmul.f32 %v661, %v810
      %v812 = vmul.f32 %v662, %v810
      %v813 = vadd.f32 %v485, %v811
      %v814 = vadd.f32 %v486, %v812
      %v815 = vld [vmem:[%s1 + $0x1d] sm:$0x1]
      %v816 = vlaneseq
      %v817 = vshrl.u32 %v816, 7
      %v818 = vsub.s32 0, %v817
      %v819 = vrot.slane %v815, %v818
      %v820 = vmul.f32 %v605, %v819
      %v821 = vmul.f32 %v606, %v819
      %v822 = vadd.f32 %v813, %v820
      %v823 = vadd.f32 %v814, %v821
      %v824 = vld [vmem:[%s1 + $0x1] sm:$0x1]
      %v825 = vlaneseq
      %v826 = vshrl.u32 %v825, 7
      %v827 = vsub.s32 0, %v826
      %v828 = vrot.slane %v824, %v827
      %v829 = vmul.f32 %v777, %v828
      %v830 = vmul.f32 %v778, %v828
      %v831 = vadd.f32 %v521, %v829
      %v832 = vadd.f32 %v522, %v830
      %v833 = vld [vmem:[%s1 + $0x9] sm:$0x1]
      %v834 = vlaneseq
      %v835 = vshrl.u32 %v834, 7
      %v836 = vsub.s32 0, %v835
      %v837 = vrot.slane %v833, %v836
      %v838 = vmul.f32 %v661, %v837
      %v839 = vmul.f32 %v662, %v837
      %v840 = vadd.f32 %v831, %v838
      %v841 = vadd.f32 %v832, %v839
      %v842 = vld [vmem:[%s1 + $0x19] sm:$0x1]
      %v843 = vlaneseq
      %v844 = vshrl.u32 %v843, 7
      %v845 = vsub.s32 0, %v844
      %v846 = vrot.slane %v842, %v845
      %v847 = vmul.f32 %v719, %v846
      %v848 = vmul.f32 %v720, %v846
      %v849 = vadd.f32 %v840, %v847
      %v850 = vadd.f32 %v841, %v848
      %v851 = vld [vmem:[%s1 + $0x21] sm:$0x1]
      %v852 = vlaneseq
      %v853 = vshrl.u32 %v852, 7
      %v854 = vsub.s32 0, %v853
      %v855 = vrot.slane %v851, %v854
      %v856 = vmul.f32 %v605, %v855
      %v857 = vmul.f32 %v606, %v855
      %v858 = vadd.f32 %v849, %v856
      %v859 = vadd.f32 %v850, %v857
      %s860 = scalar_lea.vmem %s165, 32
      %v861 = vld [vmem:[%s860] sm:$0xff]
      %v862 = vld [vmem:[%s860 + $0x8] sm:$0xff]
      %v865 = vrot.slane %v861, 1
      %v866 = vrot.slane %v862, 1
      %v867 = vsel %vm182, %v865, %v866
      %v870 = vsel %vm182, %v866, 0.0
      %871 = vrot.lane.b32.xlu0 %v861, 127
      %v872 = vpop.permute.xlu0 %871
      %873 = vrot.lane.b32.xlu0 %v862, 127
      %v874 = vpop.permute.xlu0 %873
      %v877 = vsel %vm195, %v872, 0.0
      %v878 = vsel %vm195, %v874, 0.0
      %880 = vrot.lane.b32.xlu0 %v867, 127
      %v881 = vpop.permute.xlu0 %880
      %882 = vrot.lane.b32.xlu0 %v870, 127
      %v883 = vpop.permute.xlu0 %882
      %v886 = vsel %vm195, %v881, 0.0
      %v887 = vsel %vm195, %v883, 0.0
      %888 = vrot.lane.b32.xlu0 %v861, 16
      %v889 = vpop.permute.xlu0 %888
      %890 = vrot.lane.b32.xlu0 %v862, 16
      %v891 = vpop.permute.xlu0 %890
      %894 = vrot.lane.b32.xlu0 %v861, 32
      %v895 = vpop.permute.xlu0 %894
      %896 = vrot.lane.b32.xlu0 %v862, 32
      %v897 = vpop.permute.xlu0 %896
      %900 = vrot.lane.b32.xlu0 %v861, 48
      %v901 = vpop.permute.xlu0 %900
      %902 = vrot.lane.b32.xlu0 %v862, 48
      %v903 = vpop.permute.xlu0 %902
      %906 = vrot.lane.b32.xlu0 %v861, 64
      %v907 = vpop.permute.xlu0 %906
      %908 = vrot.lane.b32.xlu0 %v862, 64
      %v909 = vpop.permute.xlu0 %908
      %912 = vrot.lane.b32.xlu0 %v861, 80
      %v913 = vpop.permute.xlu0 %912
      %914 = vrot.lane.b32.xlu0 %v862, 80
      %v915 = vpop.permute.xlu0 %914
      %918 = vrot.lane.b32.xlu0 %v861, 96
      %v919 = vpop.permute.xlu0 %918
      %920 = vrot.lane.b32.xlu0 %v862, 96
      %v921 = vpop.permute.xlu0 %920
      %924 = vrot.lane.b32.xlu0 %v861, 112
      %v925 = vpop.permute.xlu0 %924
      %926 = vrot.lane.b32.xlu0 %v862, 112
      %v927 = vpop.permute.xlu0 %926
      %v930 = vsel %vm249, %v861, %v889
      %v931 = vsel %vm249, %v862, %v891
      %v932 = vsel %vm252, %v930, %v895
      %v933 = vsel %vm252, %v931, %v897
      %v934 = vsel %vm255, %v932, %v901
      %v935 = vsel %vm255, %v933, %v903
      %v936 = vsel %vm258, %v934, %v907
      %v937 = vsel %vm258, %v935, %v909
      %v938 = vsel %vm261, %v936, %v913
      %v939 = vsel %vm261, %v937, %v915
      %v940 = vsel %vm264, %v938, %v919
      %v941 = vsel %vm264, %v939, %v921
      %v942 = vsel %vm267, %v940, %v925
      %v943 = vsel %vm267, %v941, %v927
      %944 = vrot.lane.b32.xlu0 %v867, 16
      %v945 = vpop.permute.xlu0 %944
      %946 = vrot.lane.b32.xlu0 %v870, 16
      %v947 = vpop.permute.xlu0 %946
      %950 = vrot.lane.b32.xlu0 %v867, 32
      %v951 = vpop.permute.xlu0 %950
      %952 = vrot.lane.b32.xlu0 %v870, 32
      %v953 = vpop.permute.xlu0 %952
      %956 = vrot.lane.b32.xlu0 %v867, 48
      %v957 = vpop.permute.xlu0 %956
      %958 = vrot.lane.b32.xlu0 %v870, 48
      %v959 = vpop.permute.xlu0 %958
      %962 = vrot.lane.b32.xlu0 %v867, 64
      %v963 = vpop.permute.xlu0 %962
      %964 = vrot.lane.b32.xlu0 %v870, 64
      %v965 = vpop.permute.xlu0 %964
      %968 = vrot.lane.b32.xlu0 %v867, 80
      %v969 = vpop.permute.xlu0 %968
      %970 = vrot.lane.b32.xlu0 %v870, 80
      %v971 = vpop.permute.xlu0 %970
      %974 = vrot.lane.b32.xlu0 %v867, 96
      %v975 = vpop.permute.xlu0 %974
      %976 = vrot.lane.b32.xlu0 %v870, 96
      %v977 = vpop.permute.xlu0 %976
      %980 = vrot.lane.b32.xlu0 %v867, 112
      %v981 = vpop.permute.xlu0 %980
      %982 = vrot.lane.b32.xlu0 %v870, 112
      %v983 = vpop.permute.xlu0 %982
      %v986 = vsel %vm249, %v867, %v945
      %v987 = vsel %vm249, %v870, %v947
      %v988 = vsel %vm252, %v986, %v951
      %v989 = vsel %vm252, %v987, %v953
      %v990 = vsel %vm255, %v988, %v957
      %v991 = vsel %vm255, %v989, %v959
      %v992 = vsel %vm258, %v990, %v963
      %v993 = vsel %vm258, %v991, %v965
      %v994 = vsel %vm261, %v992, %v969
      %v995 = vsel %vm261, %v993, %v971
      %v996 = vsel %vm264, %v994, %v975
      %v997 = vsel %vm264, %v995, %v977
      %v998 = vsel %vm267, %v996, %v981
      %v999 = vsel %vm267, %v997, %v983
      %1002 = vrot.lane.b32.xlu0 %v877, 16
      %v1003 = vpop.permute.xlu0 %1002
      %1004 = vrot.lane.b32.xlu0 %v878, 16
      %v1005 = vpop.permute.xlu0 %1004
      %1008 = vrot.lane.b32.xlu0 %v877, 32
      %v1009 = vpop.permute.xlu0 %1008
      %1010 = vrot.lane.b32.xlu0 %v878, 32
      %v1011 = vpop.permute.xlu0 %1010
      %1014 = vrot.lane.b32.xlu0 %v877, 48
      %v1015 = vpop.permute.xlu0 %1014
      %1016 = vrot.lane.b32.xlu0 %v878, 48
      %v1017 = vpop.permute.xlu0 %1016
      %1020 = vrot.lane.b32.xlu0 %v877, 64
      %v1021 = vpop.permute.xlu0 %1020
      %1022 = vrot.lane.b32.xlu0 %v878, 64
      %v1023 = vpop.permute.xlu0 %1022
      %1026 = vrot.lane.b32.xlu0 %v877, 80
      %v1027 = vpop.permute.xlu0 %1026
      %1028 = vrot.lane.b32.xlu0 %v878, 80
      %v1029 = vpop.permute.xlu0 %1028
      %1032 = vrot.lane.b32.xlu0 %v877, 96
      %v1033 = vpop.permute.xlu0 %1032
      %1034 = vrot.lane.b32.xlu0 %v878, 96
      %v1035 = vpop.permute.xlu0 %1034
      %1038 = vrot.lane.b32.xlu0 %v877, 112
      %v1039 = vpop.permute.xlu0 %1038
      %1040 = vrot.lane.b32.xlu0 %v878, 112
      %v1041 = vpop.permute.xlu0 %1040
      %v1044 = vsel %vm249, %v877, %v1003
      %v1045 = vsel %vm249, %v878, %v1005
      %v1046 = vsel %vm252, %v1044, %v1009
      %v1047 = vsel %vm252, %v1045, %v1011
      %v1048 = vsel %vm255, %v1046, %v1015
      %v1049 = vsel %vm255, %v1047, %v1017
      %v1050 = vsel %vm258, %v1048, %v1021
      %v1051 = vsel %vm258, %v1049, %v1023
      %v1052 = vsel %vm261, %v1050, %v1027
      %v1053 = vsel %vm261, %v1051, %v1029
      %v1054 = vsel %vm264, %v1052, %v1033
      %v1055 = vsel %vm264, %v1053, %v1035
      %v1056 = vsel %vm267, %v1054, %v1039
      %v1057 = vsel %vm267, %v1055, %v1041
      %1060 = vrot.lane.b32.xlu0 %v886, 16
      %v1061 = vpop.permute.xlu0 %1060
      %1062 = vrot.lane.b32.xlu0 %v887, 16
      %v1063 = vpop.permute.xlu0 %1062
      %1066 = vrot.lane.b32.xlu0 %v886, 32
      %v1067 = vpop.permute.xlu0 %1066
      %1068 = vrot.lane.b32.xlu0 %v887, 32
      %v1069 = vpop.permute.xlu0 %1068
      %1072 = vrot.lane.b32.xlu0 %v886, 48
      %v1073 = vpop.permute.xlu0 %1072
      %1074 = vrot.lane.b32.xlu0 %v887, 48
      %v1075 = vpop.permute.xlu0 %1074
      %1078 = vrot.lane.b32.xlu0 %v886, 64
      %v1079 = vpop.permute.xlu0 %1078
      %1080 = vrot.lane.b32.xlu0 %v887, 64
      %v1081 = vpop.permute.xlu0 %1080
      %1084 = vrot.lane.b32.xlu0 %v886, 80
      %v1085 = vpop.permute.xlu0 %1084
      %1086 = vrot.lane.b32.xlu0 %v887, 80
      %v1087 = vpop.permute.xlu0 %1086
      %1090 = vrot.lane.b32.xlu0 %v886, 96
      %v1091 = vpop.permute.xlu0 %1090
      %1092 = vrot.lane.b32.xlu0 %v887, 96
      %v1093 = vpop.permute.xlu0 %1092
      %1096 = vrot.lane.b32.xlu0 %v886, 112
      %v1097 = vpop.permute.xlu0 %1096
      %1098 = vrot.lane.b32.xlu0 %v887, 112
      %v1099 = vpop.permute.xlu0 %1098
      %v1102 = vsel %vm249, %v886, %v1061
      %v1103 = vsel %vm249, %v887, %v1063
      %v1104 = vsel %vm252, %v1102, %v1067
      %v1105 = vsel %vm252, %v1103, %v1069
      %v1106 = vsel %vm255, %v1104, %v1073
      %v1107 = vsel %vm255, %v1105, %v1075
      %v1108 = vsel %vm258, %v1106, %v1079
      %v1109 = vsel %vm258, %v1107, %v1081
      %v1110 = vsel %vm261, %v1108, %v1085
      %v1111 = vsel %vm261, %v1109, %v1087
      %v1112 = vsel %vm264, %v1110, %v1091
      %v1113 = vsel %vm264, %v1111, %v1093
      %v1114 = vsel %vm267, %v1112, %v1097
      %v1115 = vsel %vm267, %v1113, %v1099
      %v1116 = vld [vmem:[%s1 + $0x12] sm:$0x1]
      %v1117 = vlaneseq
      %v1118 = vshrl.u32 %v1117, 7
      %v1119 = vsub.s32 0, %v1118
      %v1120 = vrot.slane %v1116, %v1119
      %v1121 = vmul.f32 %v942, %v1120
      %v1122 = vmul.f32 %v943, %v1120
      %v1123 = vadd.f32 %v786, %v1121
      %v1124 = vadd.f32 %v787, %v1122
      %v1125 = vld [vmem:[%s1 + $0xe] sm:$0x1]
      %v1126 = vlaneseq
      %v1127 = vshrl.u32 %v1126, 7
      %v1128 = vsub.s32 0, %v1127
      %v1129 = vrot.slane %v1125, %v1128
      %v1130 = vmul.f32 %v1056, %v1129
      %v1131 = vmul.f32 %v1057, %v1129
      %v1132 = vadd.f32 %v804, %v1130
      %v1133 = vadd.f32 %v805, %v1131
      %v1134 = vld [vmem:[%s1 + $0x16] sm:$0x1]
      %v1135 = vlaneseq
      %v1136 = vshrl.u32 %v1135, 7
      %v1137 = vsub.s32 0, %v1136
      %v1138 = vrot.slane %v1134, %v1137
      %v1139 = vmul.f32 %v942, %v1138
      %v1140 = vmul.f32 %v943, %v1138
      %v1141 = vadd.f32 %v1132, %v1139
      %v1142 = vadd.f32 %v1133, %v1140
      %v1143 = vld [vmem:[%s1 + $0x6] sm:$0x1]
      %v1144 = vlaneseq
      %v1145 = vshrl.u32 %v1144, 7
      %v1146 = vsub.s32 0, %v1145
      %v1147 = vrot.slane %v1143, %v1146
      %v1148 = vmul.f32 %v998, %v1147
      %v1149 = vmul.f32 %v999, %v1147
      %v1150 = vadd.f32 %v822, %v1148
      %v1151 = vadd.f32 %v823, %v1149
      %v1152 = vld [vmem:[%s1 + $0x1e] sm:$0x1]
      %v1153 = vlaneseq
      %v1154 = vshrl.u32 %v1153, 7
      %v1155 = vsub.s32 0, %v1154
      %v1156 = vrot.slane %v1152, %v1155
      %v1157 = vmul.f32 %v942, %v1156
      %v1158 = vmul.f32 %v943, %v1156
      %v1159 = vadd.f32 %v1150, %v1157
      %v1160 = vadd.f32 %v1151, %v1158
      %v1161 = vld [vmem:[%s1 + $0x2] sm:$0x1]
      %v1162 = vlaneseq
      %v1163 = vshrl.u32 %v1162, 7
      %v1164 = vsub.s32 0, %v1163
      %v1165 = vrot.slane %v1161, %v1164
      %v1166 = vmul.f32 %v1114, %v1165
      %v1167 = vmul.f32 %v1115, %v1165
      %v1168 = vadd.f32 %v858, %v1166
      %v1169 = vadd.f32 %v859, %v1167
      %v1170 = vld [vmem:[%s1 + $0xa] sm:$0x1]
      %v1171 = vlaneseq
      %v1172 = vshrl.u32 %v1171, 7
      %v1173 = vsub.s32 0, %v1172
      %v1174 = vrot.slane %v1170, %v1173
      %v1175 = vmul.f32 %v998, %v1174
      %v1176 = vmul.f32 %v999, %v1174
      %v1177 = vadd.f32 %v1168, %v1175
      %v1178 = vadd.f32 %v1169, %v1176
      %v1179 = vld [vmem:[%s1 + $0x1a] sm:$0x1]
      %v1180 = vlaneseq
      %v1181 = vshrl.u32 %v1180, 7
      %v1182 = vsub.s32 0, %v1181
      %v1183 = vrot.slane %v1179, %v1182
      %v1184 = vmul.f32 %v1056, %v1183
      %v1185 = vmul.f32 %v1057, %v1183
      %v1186 = vadd.f32 %v1177, %v1184
      %v1187 = vadd.f32 %v1178, %v1185
      %v1188 = vld [vmem:[%s1 + $0x22] sm:$0x1]
      %v1189 = vlaneseq
      %v1190 = vshrl.u32 %v1189, 7
      %v1191 = vsub.s32 0, %v1190
      %v1192 = vrot.slane %v1188, %v1191
      %v1193 = vmul.f32 %v942, %v1192
      %v1194 = vmul.f32 %v943, %v1192
      %v1195 = vadd.f32 %v1186, %v1193
      %v1196 = vadd.f32 %v1187, %v1194
      %s1197 = scalar_lea.vmem %s165, 48
      %v1198 = vld [vmem:[%s1197] sm:$0xff]
      %v1199 = vld [vmem:[%s1197 + $0x8] sm:$0xff]
      %v1202 = vrot.slane %v1198, 1
      %v1203 = vrot.slane %v1199, 1
      %v1204 = vsel %vm182, %v1202, %v1203
      %v1207 = vsel %vm182, %v1203, 0.0
      %1208 = vrot.lane.b32.xlu0 %v1198, 127
      %v1209 = vpop.permute.xlu0 %1208
      %1210 = vrot.lane.b32.xlu0 %v1199, 127
      %v1211 = vpop.permute.xlu0 %1210
      %v1214 = vsel %vm195, %v1209, 0.0
      %v1215 = vsel %vm195, %v1211, 0.0
      %1217 = vrot.lane.b32.xlu0 %v1204, 127
      %v1218 = vpop.permute.xlu0 %1217
      %1219 = vrot.lane.b32.xlu0 %v1207, 127
      %v1220 = vpop.permute.xlu0 %1219
      %v1223 = vsel %vm195, %v1218, 0.0
      %v1224 = vsel %vm195, %v1220, 0.0
      %1225 = vrot.lane.b32.xlu0 %v1198, 16
      %v1226 = vpop.permute.xlu0 %1225
      %1227 = vrot.lane.b32.xlu0 %v1199, 16
      %v1228 = vpop.permute.xlu0 %1227
      %1231 = vrot.lane.b32.xlu0 %v1198, 32
      %v1232 = vpop.permute.xlu0 %1231
      %1233 = vrot.lane.b32.xlu0 %v1199, 32
      %v1234 = vpop.permute.xlu0 %1233
      %1237 = vrot.lane.b32.xlu0 %v1198, 48
      %v1238 = vpop.permute.xlu0 %1237
      %1239 = vrot.lane.b32.xlu0 %v1199, 48
      %v1240 = vpop.permute.xlu0 %1239
      %1243 = vrot.lane.b32.xlu0 %v1198, 64
      %v1244 = vpop.permute.xlu0 %1243
      %1245 = vrot.lane.b32.xlu0 %v1199, 64
      %v1246 = vpop.permute.xlu0 %1245
      %1249 = vrot.lane.b32.xlu0 %v1198, 80
      %v1250 = vpop.permute.xlu0 %1249
      %1251 = vrot.lane.b32.xlu0 %v1199, 80
      %v1252 = vpop.permute.xlu0 %1251
      %1255 = vrot.lane.b32.xlu0 %v1198, 96
      %v1256 = vpop.permute.xlu0 %1255
      %1257 = vrot.lane.b32.xlu0 %v1199, 96
      %v1258 = vpop.permute.xlu0 %1257
      %1261 = vrot.lane.b32.xlu0 %v1198, 112
      %v1262 = vpop.permute.xlu0 %1261
      %1263 = vrot.lane.b32.xlu0 %v1199, 112
      %v1264 = vpop.permute.xlu0 %1263
      %v1267 = vsel %vm249, %v1198, %v1226
      %v1268 = vsel %vm249, %v1199, %v1228
      %v1269 = vsel %vm252, %v1267, %v1232
      %v1270 = vsel %vm252, %v1268, %v1234
      %v1271 = vsel %vm255, %v1269, %v1238
      %v1272 = vsel %vm255, %v1270, %v1240
      %v1273 = vsel %vm258, %v1271, %v1244
      %v1274 = vsel %vm258, %v1272, %v1246
      %v1275 = vsel %vm261, %v1273, %v1250
      %v1276 = vsel %vm261, %v1274, %v1252
      %v1277 = vsel %vm264, %v1275, %v1256
      %v1278 = vsel %vm264, %v1276, %v1258
      %v1279 = vsel %vm267, %v1277, %v1262
      %v1280 = vsel %vm267, %v1278, %v1264
      %1281 = vrot.lane.b32.xlu0 %v1204, 16
      %v1282 = vpop.permute.xlu0 %1281
      %1283 = vrot.lane.b32.xlu0 %v1207, 16
      %v1284 = vpop.permute.xlu0 %1283
      %1287 = vrot.lane.b32.xlu0 %v1204, 32
      %v1288 = vpop.permute.xlu0 %1287
      %1289 = vrot.lane.b32.xlu0 %v1207, 32
      %v1290 = vpop.permute.xlu0 %1289
      %1293 = vrot.lane.b32.xlu0 %v1204, 48
      %v1294 = vpop.permute.xlu0 %1293
      %1295 = vrot.lane.b32.xlu0 %v1207, 48
      %v1296 = vpop.permute.xlu0 %1295
      %1299 = vrot.lane.b32.xlu0 %v1204, 64
      %v1300 = vpop.permute.xlu0 %1299
      %1301 = vrot.lane.b32.xlu0 %v1207, 64
      %v1302 = vpop.permute.xlu0 %1301
      %1305 = vrot.lane.b32.xlu0 %v1204, 80
      %v1306 = vpop.permute.xlu0 %1305
      %1307 = vrot.lane.b32.xlu0 %v1207, 80
      %v1308 = vpop.permute.xlu0 %1307
      %1311 = vrot.lane.b32.xlu0 %v1204, 96
      %v1312 = vpop.permute.xlu0 %1311
      %1313 = vrot.lane.b32.xlu0 %v1207, 96
      %v1314 = vpop.permute.xlu0 %1313
      %1317 = vrot.lane.b32.xlu0 %v1204, 112
      %v1318 = vpop.permute.xlu0 %1317
      %1319 = vrot.lane.b32.xlu0 %v1207, 112
      %v1320 = vpop.permute.xlu0 %1319
      %v1323 = vsel %vm249, %v1204, %v1282
      %v1324 = vsel %vm249, %v1207, %v1284
      %v1325 = vsel %vm252, %v1323, %v1288
      %v1326 = vsel %vm252, %v1324, %v1290
      %v1327 = vsel %vm255, %v1325, %v1294
      %v1328 = vsel %vm255, %v1326, %v1296
      %v1329 = vsel %vm258, %v1327, %v1300
      %v1330 = vsel %vm258, %v1328, %v1302
      %v1331 = vsel %vm261, %v1329, %v1306
      %v1332 = vsel %vm261, %v1330, %v1308
      %v1333 = vsel %vm264, %v1331, %v1312
      %v1334 = vsel %vm264, %v1332, %v1314
      %v1335 = vsel %vm267, %v1333, %v1318
      %v1336 = vsel %vm267, %v1334, %v1320
      %1339 = vrot.lane.b32.xlu0 %v1214, 16
      %v1340 = vpop.permute.xlu0 %1339
      %1341 = vrot.lane.b32.xlu0 %v1215, 16
      %v1342 = vpop.permute.xlu0 %1341
      %1345 = vrot.lane.b32.xlu0 %v1214, 32
      %v1346 = vpop.permute.xlu0 %1345
      %1347 = vrot.lane.b32.xlu0 %v1215, 32
      %v1348 = vpop.permute.xlu0 %1347
      %1351 = vrot.lane.b32.xlu0 %v1214, 48
      %v1352 = vpop.permute.xlu0 %1351
      %1353 = vrot.lane.b32.xlu0 %v1215, 48
      %v1354 = vpop.permute.xlu0 %1353
      %1357 = vrot.lane.b32.xlu0 %v1214, 64
      %v1358 = vpop.permute.xlu0 %1357
      %1359 = vrot.lane.b32.xlu0 %v1215, 64
      %v1360 = vpop.permute.xlu0 %1359
      %1363 = vrot.lane.b32.xlu0 %v1214, 80
      %v1364 = vpop.permute.xlu0 %1363
      %1365 = vrot.lane.b32.xlu0 %v1215, 80
      %v1366 = vpop.permute.xlu0 %1365
      %1369 = vrot.lane.b32.xlu0 %v1214, 96
      %v1370 = vpop.permute.xlu0 %1369
      %1371 = vrot.lane.b32.xlu0 %v1215, 96
      %v1372 = vpop.permute.xlu0 %1371
      %1375 = vrot.lane.b32.xlu0 %v1214, 112
      %v1376 = vpop.permute.xlu0 %1375
      %1377 = vrot.lane.b32.xlu0 %v1215, 112
      %v1378 = vpop.permute.xlu0 %1377
      %v1381 = vsel %vm249, %v1214, %v1340
      %v1382 = vsel %vm249, %v1215, %v1342
      %v1383 = vsel %vm252, %v1381, %v1346
      %v1384 = vsel %vm252, %v1382, %v1348
      %v1385 = vsel %vm255, %v1383, %v1352
      %v1386 = vsel %vm255, %v1384, %v1354
      %v1387 = vsel %vm258, %v1385, %v1358
      %v1388 = vsel %vm258, %v1386, %v1360
      %v1389 = vsel %vm261, %v1387, %v1364
      %v1390 = vsel %vm261, %v1388, %v1366
      %v1391 = vsel %vm264, %v1389, %v1370
      %v1392 = vsel %vm264, %v1390, %v1372
      %v1393 = vsel %vm267, %v1391, %v1376
      %v1394 = vsel %vm267, %v1392, %v1378
      %1397 = vrot.lane.b32.xlu0 %v1223, 16
      %v1398 = vpop.permute.xlu0 %1397
      %1399 = vrot.lane.b32.xlu0 %v1224, 16
      %v1400 = vpop.permute.xlu0 %1399
      %1403 = vrot.lane.b32.xlu0 %v1223, 32
      %v1404 = vpop.permute.xlu0 %1403
      %1405 = vrot.lane.b32.xlu0 %v1224, 32
      %v1406 = vpop.permute.xlu0 %1405
      %1409 = vrot.lane.b32.xlu0 %v1223, 48
      %v1410 = vpop.permute.xlu0 %1409
      %1411 = vrot.lane.b32.xlu0 %v1224, 48
      %v1412 = vpop.permute.xlu0 %1411
      %1415 = vrot.lane.b32.xlu0 %v1223, 64
      %v1416 = vpop.permute.xlu0 %1415
      %1417 = vrot.lane.b32.xlu0 %v1224, 64
      %v1418 = vpop.permute.xlu0 %1417
      %1421 = vrot.lane.b32.xlu0 %v1223, 80
      %v1422 = vpop.permute.xlu0 %1421
      %1423 = vrot.lane.b32.xlu0 %v1224, 80
      %v1424 = vpop.permute.xlu0 %1423
      %1427 = vrot.lane.b32.xlu0 %v1223, 96
      %v1428 = vpop.permute.xlu0 %1427
      %1429 = vrot.lane.b32.xlu0 %v1224, 96
      %v1430 = vpop.permute.xlu0 %1429
      %1433 = vrot.lane.b32.xlu0 %v1223, 112
      %v1434 = vpop.permute.xlu0 %1433
      %1435 = vrot.lane.b32.xlu0 %v1224, 112
      %v1436 = vpop.permute.xlu0 %1435
      %v1439 = vsel %vm249, %v1223, %v1398
      %v1440 = vsel %vm249, %v1224, %v1400
      %v1441 = vsel %vm252, %v1439, %v1404
      %v1442 = vsel %vm252, %v1440, %v1406
      %v1443 = vsel %vm255, %v1441, %v1410
      %v1444 = vsel %vm255, %v1442, %v1412
      %v1445 = vsel %vm258, %v1443, %v1416
      %v1446 = vsel %vm258, %v1444, %v1418
      %v1447 = vsel %vm261, %v1445, %v1422
      %v1448 = vsel %vm261, %v1446, %v1424
      %v1449 = vsel %vm264, %v1447, %v1428
      %v1450 = vsel %vm264, %v1448, %v1430
      %v1451 = vsel %vm267, %v1449, %v1434
      %v1452 = vsel %vm267, %v1450, %v1436
      %v1453 = vld [vmem:[%s1 + $0x13] sm:$0x1]
      %v1454 = vlaneseq
      %v1455 = vshrl.u32 %v1454, 7
      %v1456 = vsub.s32 0, %v1455
      %v1457 = vrot.slane %v1453, %v1456
      %v1458 = vmul.f32 %v1279, %v1457
      %v1459 = vmul.f32 %v1280, %v1457
      %v1460 = vadd.f32 %v1123, %v1458
      %v1461 = vadd.f32 %v1124, %v1459
      %v1462 = vld [vmem:[%s1 + $0xf] sm:$0x1]
      %v1463 = vlaneseq
      %v1464 = vshrl.u32 %v1463, 7
      %v1465 = vsub.s32 0, %v1464
      %v1466 = vrot.slane %v1462, %v1465
      %v1467 = vmul.f32 %v1393, %v1466
      %v1468 = vmul.f32 %v1394, %v1466
      %v1469 = vadd.f32 %v1141, %v1467
      %v1470 = vadd.f32 %v1142, %v1468
      %v1471 = vld [vmem:[%s1 + $0x17] sm:$0x1]
      %v1472 = vlaneseq
      %v1473 = vshrl.u32 %v1472, 7
      %v1474 = vsub.s32 0, %v1473
      %v1475 = vrot.slane %v1471, %v1474
      %v1476 = vmul.f32 %v1279, %v1475
      %v1477 = vmul.f32 %v1280, %v1475
      %v1478 = vadd.f32 %v1469, %v1476
      %v1479 = vadd.f32 %v1470, %v1477
      %v1480 = vld [vmem:[%s1 + $0x7] sm:$0x1]
      %v1481 = vlaneseq
      %v1482 = vshrl.u32 %v1481, 7
      %v1483 = vsub.s32 0, %v1482
      %v1484 = vrot.slane %v1480, %v1483
      %v1485 = vmul.f32 %v1335, %v1484
      %v1486 = vmul.f32 %v1336, %v1484
      %v1487 = vadd.f32 %v1159, %v1485
      %v1488 = vadd.f32 %v1160, %v1486
      %v1489 = vld [vmem:[%s1 + $0x1f] sm:$0x1]
      %v1490 = vlaneseq
      %v1491 = vshrl.u32 %v1490, 7
      %v1492 = vsub.s32 0, %v1491
      %v1493 = vrot.slane %v1489, %v1492
      %v1494 = vmul.f32 %v1279, %v1493
      %v1495 = vmul.f32 %v1280, %v1493
      %v1496 = vadd.f32 %v1487, %v1494
      %v1497 = vadd.f32 %v1488, %v1495
      %v1498 = vld [vmem:[%s1 + $0x3] sm:$0x1]
      %v1499 = vlaneseq
      %v1500 = vshrl.u32 %v1499, 7
      %v1501 = vsub.s32 0, %v1500
      %v1502 = vrot.slane %v1498, %v1501
      %v1503 = vmul.f32 %v1451, %v1502
      %v1504 = vmul.f32 %v1452, %v1502
      %v1505 = vadd.f32 %v1195, %v1503
      %v1506 = vadd.f32 %v1196, %v1504
      %v1507 = vld [vmem:[%s1 + $0xb] sm:$0x1]
      %v1508 = vlaneseq
      %v1509 = vshrl.u32 %v1508, 7
      %v1510 = vsub.s32 0, %v1509
      %v1511 = vrot.slane %v1507, %v1510
      %v1512 = vmul.f32 %v1335, %v1511
      %v1513 = vmul.f32 %v1336, %v1511
      %v1514 = vadd.f32 %v1505, %v1512
      %v1515 = vadd.f32 %v1506, %v1513
      %v1516 = vld [vmem:[%s1 + $0x1b] sm:$0x1]
      %v1517 = vlaneseq
      %v1518 = vshrl.u32 %v1517, 7
      %v1519 = vsub.s32 0, %v1518
      %v1520 = vrot.slane %v1516, %v1519
      %v1521 = vmul.f32 %v1393, %v1520
      %v1522 = vmul.f32 %v1394, %v1520
      %v1523 = vadd.f32 %v1514, %v1521
      %v1524 = vadd.f32 %v1515, %v1522
      %v1525 = vld [vmem:[%s1 + $0x23] sm:$0x1]
      %v1526 = vlaneseq
      %v1527 = vshrl.u32 %v1526, 7
      %v1528 = vsub.s32 0, %v1527
      %v1529 = vrot.slane %v1525, %v1528
      %v1530 = vmul.f32 %v1279, %v1529
      %v1531 = vmul.f32 %v1280, %v1529
      %v1532 = vadd.f32 %v1523, %v1530
      %v1533 = vadd.f32 %v1524, %v1531
      %v1534 = vmax.f32 %v1460, 0.0
      %v1535 = vmax.f32 %v1461, 0.0
      %1536 = vst [vmem:[%s170] sm:$0xff] %v1534
      %1537 = vst [vmem:[%s170 + $0x8] sm:$0xff] %v1535
      %v1538 = vmax.f32 %v1478, 0.0
      %v1539 = vmax.f32 %v1479, 0.0
      %s1540 = scalar_lea.vmem %s170, 16
      %1541 = vst [vmem:[%s1540] sm:$0xff] %v1538
      %1542 = vst [vmem:[%s1540 + $0x8] sm:$0xff] %v1539
      %v1543 = vmax.f32 %v1496, 0.0
      %v1544 = vmax.f32 %v1497, 0.0
      %s1545 = scalar_lea.vmem %s170, 32
      %1546 = vst [vmem:[%s1545] sm:$0xff] %v1543
      %1547 = vst [vmem:[%s1545 + $0x8] sm:$0xff] %v1544
      %v1548 = vmax.f32 %v1532, 0.0
      %v1549 = vmax.f32 %v1533, 0.0
      %s1550 = scalar_lea.vmem %s170, 48
      %1551 = vst [vmem:[%s1550] sm:$0xff] %v1548
      %1552 = vst [vmem:[%s1550 + $0x8] sm:$0xff] %v1549
      %p1553 = scmp.lt.s32.totalorder %s14, 1
      %s1554 = scalar_select %p1553, %s14, 1
      %s1555 = smul.addr %s1554, 8
      %s1556 = smul.addr %s1555, 8
      %s1557 = scalar_lea.vmem %s3, %s1556
      // Predicated region
      $region33: #{up_deconv_forward.1} parent=31 // pred_check
        %p1558 = pneg %p100
      $region34: #{up_deconv_forward.1} parent=31 // pred_check_branch
        %1560 = sbr.rel (%p1558) target = $region36
      $region35: #{up_deconv_forward.1} parent=31 // pred_region
        _
      $region36: #{up_deconv_forward.1} parent=31 // pred_fallthru
        _
    $region32: #{up_deconv_forward.1} parent=5 // pred_fallthru
      _
    %p1561 = scmp.le.s32.totalorder 2, %s9
    // Predicated region
    $region37: #{up_deconv_forward.1} parent=5 // pred_check
      %p1562 = pneg %p1561
    $region38: #{up_deconv_forward.1} parent=5 // pred_check_branch
      %1564 = sbr.rel (%p1562) target = $region40
    $region39: #{up_deconv_forward.1} parent=5 // pred_region
      %s1565 = ssub.s32 %s9, 2
      // Predicated region
      $region41: #{up_deconv_forward.1} parent=39 // pred_check
        %p1566 = pneg %p106
      $region42: #{up_deconv_forward.1} parent=39 // pred_check_branch
        %1568 = sbr.rel (%p1566) target = $region44
      $region43: #{up_deconv_forward.1} parent=39 // pred_region
        %p1569 = scmp.lt.s32.totalorder %s15, 1
        %s1570 = scalar_select %p1569, %s15, 1
        %s1571 = smul.addr %s1570, 8
        %s1572 = smul.addr %s1571, 8
        %s1573 = scalar_lea.vmem %s3, %s1572
      $region44: #{up_deconv_forward.1} parent=39 // pred_fallthru
        _
    $region40: #{up_deconv_forward.1} parent=5 // pred_fallthru
      _
  $region6: #{up_deconv_forward.1} parent=0 // loop_footer
    %s13 = sadd.s32 1, %s9
  $region7: #{up_deconv_forward.1} parent=0 // loop_footer_branch
    %8 = sbr.rel target = $region3
  $region8: #{up_deconv_forward.1} parent=0 // loop_exit
    _

</llo_original>
